<compile_context>
chip_gen: v6e
topology: v6e:2x2x1
jax: 0.10.0
libtpu: 0.0.40
codegen_flags: <defaults>
</compile_context>

<pallas_src>
import math

import jax
import jax.numpy as jnp
from jax.experimental import pallas as pl
from jax.experimental.pallas import tpu as pltpu

# ----------------------------- model hyper-params -----------------------------
D = 8          # data dim
D1 = D // 2    # identity half of coupling
D2 = D - D1    # transformed half of coupling
H = 32         # MLP hidden width
CE = 16        # cond_embed_dim
M = 4          # n_mixtures
TB = 128       # batch tile -> lanes (lane-dense)


# ----------------------------- shared helper -----------------------------
def _gelu(x):
    # tanh-approx GELU (see TODO above).
    return 0.5 * x * (1.0 + jnp.tanh(0.7978845608028654 * (x + 0.044715 * x * x * x)))


# ----------------------------- the Pallas kernel -----------------------------
def _vmm_kernel(x_ref, lp_ref,
                an_ref, vorA_ref, vorq_ref, mix_ref,
                wc1x_ref, wcmid_ref, wcout_ref, bias_ref,
                xo_ref, lo_ref):
    f32 = jnp.float32
    x = x_ref[...].astype(f32)        # (D, TB)   batch on lanes
    logp = lp_ref[...].astype(f32)    # (1, TB)
    an = an_ref[...]                  # (4D, TB)  [ew0; b0*ew0; ew1; b1*ew1] pre-broadcast
    bias = bias_ref[...]              # (3H+4D, TB) pre-broadcast coupling biases

    def coupling(x, logp, h0, W1x, W2, b2, W3, b3):
        # W1x has zero columns for the transformed half; W3/b3 are padded to 2*D rows with
        # zeros for the identity dims, so no concatenation / select is needed anywhere.
        # h0 is either the (pre-broadcast) first-layer bias or the per-mixture cond+bias term.
        h = _gelu(jnp.dot(W1x, x, preferred_element_type=f32) + h0)
        h = _gelu(jnp.dot(W2, h, preferred_element_type=f32) + b2)
        out = jnp.dot(W3, h, preferred_element_type=f32) + b3       # (2D, TB)
        s = jnp.tanh(out[:D, :])                                    # identity rows -> 0
        t = out[D:, :]                                              # identity rows -> 0
        y = x * jnp.exp(s) + t
        return y, logp - jnp.sum(s, axis=0, keepdims=True)

    # ---- flows[0]: ActNorm -> Coupling -> ActNorm (unconditional) ----
    x = x * an[0:D, :] + an[D:2 * D, :]
    x, logp = coupling(x, logp, bias[0:H, :],
                       wc1x_ref[0], wcmid_ref[0], bias[H:2 * H, :],
                       wcout_ref[0], bias[2 * H:2 * H + 2 * D, :])
    x = x * an[2 * D:3 * D, :] + an[3 * D:4 * D, :]

    # ---- VoronoiTessellation (skip_transform=True): nearest-anchor one-hot mask ----
    # score = ||a||^2 - 2 a.x  (the per-sample ||x||^2 term is argmin-invariant and dropped)
    score = jnp.dot(vorA_ref[...], x, preferred_element_type=f32) + vorq_ref[...]   # (M, TB)
    mn = jnp.min(score, axis=0, keepdims=True)
    iota = jax.lax.broadcasted_iota(jnp.int32, score.shape, 0)
    cand = jnp.where(score <= mn, iota, M)
    idx = jnp.min(cand, axis=0, keepdims=True)                      # first index on ties
    mask = (iota == idx).astype(f32)                                # (M, TB) one-hot

    # ---- gather all per-mixture precomputed quantities with one tiny matmul ----
    mix = jnp.dot(mix_ref[...], mask, preferred_element_type=f32)   # (H+4D+1, TB)
    hcond = mix[0:H, :]                  # coupling1: W1c @ cond + b1
    scale1 = mix[H:H + D, :]             # exp(an2_w)*exp(s1)
    off1 = mix[H + D:H + 2 * D, :]       # an2_b*exp(an2_w)*exp(s1) + t1
    scale2 = mix[H + 2 * D:H + 3 * D, :]
    off2 = mix[H + 3 * D:H + 4 * D, :]
    lpdelta = mix[H + 4 * D:H + 4 * D + 1, :]   # sum(s1)+sum(s2)+all ActNorm log-dets

    # ---- flows[1]: (ActNorm2∘CondAffine1) fused -> Coupling(cond) -> (ActNorm3∘CondAffine2) ----
    x = x * scale1 + off1
    x, logp = coupling(x, logp, hcond,
                       wc1x_ref[1], wcmid_ref[1], bias[2 * H + 2 * D:3 * H + 2 * D, :],
                       wcout_ref[1], bias[3 * H + 2 * D:3 * H + 4 * D, :])
    x = x * scale2 + off2
    logp = logp - lpdelta

    xo_ref[...] = x.astype(xo_ref.dtype)
    lo_ref[...] = logp.astype(lo_ref.dtype)


# ----------------------------- wrapper -----------------------------
def voronoi_mixture_forward(x, packed, logp=None):
    """Mirrors VoronoiMixtureModel.forward: returns x if logp is None, else (x, logp)."""
    return_logp = logp is not None
    b, d = x.shape
    assert d == D
    if logp is None:
        logp = jnp.zeros((b, 1), x.dtype)

    # pad batch to a multiple of the lane tile, then present batch on the lane axis
    pad = (-b) % TB
    if pad:
        x = jnp.concatenate([x, jnp.zeros((pad, D), x.dtype)], axis=0)
        logp = jnp.concatenate([logp, jnp.zeros((pad, 1), logp.dtype)], axis=0)
    bp = x.shape[0]
    x_t = x.T            # (D, bp)   layout plumbing only
    lp_t = logp.T        # (1, bp)

    grid = (bp // TB,)
    in_specs = [
        pl.BlockSpec((D, TB), lambda i: (0, i)),
        pl.BlockSpec((1, TB), lambda i: (0, i)),
    ]
    in_specs += [pl.BlockSpec(p_.shape, (lambda i, _n=p_.ndim: (0,) * _n)) for p_ in packed]

    out_specs = (
        pl.BlockSpec((D, TB), lambda i: (0, i)),
        pl.BlockSpec((1, TB), lambda i: (0, i)),
    )
    out_shape = (
        jax.ShapeDtypeStruct((D, bp), x.dtype),
        jax.ShapeDtypeStruct((1, bp), x.dtype),
    )

    xo_t, lo_t = pl.pallas_call(
        _vmm_kernel,
        grid=grid,
        in_specs=in_specs,
        out_specs=out_specs,
        out_shape=out_shape,
        compiler_params=pltpu.CompilerParams(dimension_semantics=("parallel",)),
    )(x_t, lp_t, *packed)

    xo = xo_t.T[:b]
    lo = lo_t.T[:b]
    return (xo, lo) if return_logp else xo


# ----------------------------- raw ("PyTorch-like") parameters -----------------------------
def init_raw_params(key):
    ks = iter(jax.random.split(key, 64))

    def w(shape, scale=0.1):
        return (scale * jax.random.normal(next(ks), shape)).astype(jnp.float32)

    p = {}
    for i in range(4):                                    # ActNorm1d x4 (weight=log-scale, bias)
        p[f"an{i}_w"] = w((D,), 0.05)
        p[f"an{i}_b"] = w((D,), 0.05)
    # coupling 0 (unconditional): MLP D1 -> H -> H -> 2*D2
    p["c0_W1"] = w((D1, H)); p["c0_b1"] = w((H,), 0.05)
    p["c0_W2"] = w((H, H));  p["c0_b2"] = w((H,), 0.05)
    p["c0_W3"] = w((H, 2 * D2)); p["c0_b3"] = w((2 * D2,), 0.05)
    # voronoi anchors + class embedding
    p["anchors"] = w((M, D), 1.0)
    p["embed"] = w((M, CE), 1.0)
    # cond-affine 1 & 2: MLP CE -> H -> H -> 2*D
    for j in (1, 2):
        p[f"ca{j}_W1"] = w((CE, H)); p[f"ca{j}_b1"] = w((H,), 0.05)
        p[f"ca{j}_W2"] = w((H, H));  p[f"ca{j}_b2"] = w((H,), 0.05)
        p[f"ca{j}_W3"] = w((H, 2 * D), 0.05); p[f"ca{j}_b3"] = w((2 * D,), 0.05)
    # coupling 1 (conditional): MLP (D1+CE) -> H -> H -> 2*D2
    p["c1_W1"] = w((D1 + CE, H)); p["c1_b1"] = w((H,), 0.05)
    p["c1_W2"] = w((H, H));       p["c1_b2"] = w((H,), 0.05)
    p["c1_W3"] = w((H, 2 * D2));  p["c1_b3"] = w((2 * D2,), 0.05)
    return p


# --------------------- host-side packing (hoisting / fusion, done once) ---------------------
def pack_params(p):
    f32 = jnp.float32

    def bcast(v):
        v = jnp.asarray(v, f32)
        return jnp.broadcast_to(v[:, None], (v.shape[0], TB))

    # ActNorm 0/1: hoist exp(weight); fold bias into an FMA offset (x*ew + b*ew).
    ew0 = jnp.exp(p["an0_w"]); ew1 = jnp.exp(p["an1_w"])
    an_slab = jnp.concatenate([bcast(ew0), bcast(p["an0_b"] * ew0),
                               bcast(ew1), bcast(p["an1_b"] * ew1)], axis=0)   # (4D, TB)

    # Voronoi: score = -2 A x + ||a||^2 ; ||a||^2 pre-broadcast over lanes.
    A = p["anchors"].astype(f32)
    vorA = -2.0 * A                                                             # (M, D)
    vorq = jnp.broadcast_to(jnp.sum(A * A, axis=1, keepdims=True), (M, TB))     # (M, TB)

    # Per-mixture table: both ConditionalAffine MLPs evaluated at the M class embeddings,
    # fused with ActNorm 2/3, the cond contribution (+bias) of coupling1's first layer and
    # the per-mixture constant logp decrement (incl. all four ActNorm log-dets).
    cond_all = p["embed"].astype(f32) / math.sqrt(CE)                           # (M, CE)

    def mlp(h, W1, b1, W2, b2, W3, b3):
        h = _gelu(h @ W1 + b1)
        h = _gelu(h @ W2 + b2)
        return h @ W3 + b3

    out1 = mlp(cond_all, p["ca1_W1"], p["ca1_b1"], p["ca1_W2"], p["ca1_b2"],
               p["ca1_W3"], p["ca1_b3"])
    out2 = mlp(cond_all, p["ca2_W1"], p["ca2_b1"], p["ca2_W2"], p["ca2_b2"],
               p["ca2_W3"], p["ca2_b3"])
    s1, t1 = out1[:, :D], out1[:, D:]
    s2, t2 = out2[:, :D], out2[:, D:]
    ew2 = jnp.exp(p["an2_w"]); ew3 = jnp.exp(p["an3_w"])
    es1 = jnp.exp(s1); es2 = jnp.exp(s2)
    scale1 = es1 * ew2[None, :]
    off1 = (p["an2_b"] * ew2)[None, :] * es1 + t1
    scale2 = es2 * ew3[None, :]
    off2 = (p["an3_b"] * ew3)[None, :] * es2 + t2
    hcond = cond_all @ p["c1_W1"][D1:, :] + p["c1_b1"][None, :]                 # (M, H)
    an_ld = sum(jnp.sum(p[f"an{i}_w"]) for i in range(4))
    lpdelta = an_ld + jnp.sum(s1, axis=1) + jnp.sum(s2, axis=1)                 # (M,)

    mixtab = jnp.concatenate([hcond.T, scale1.T, off1.T, scale2.T, off2.T,
                              lpdelta[None, :]], axis=0).astype(f32)            # (H+4D+1, M)

    # Couplings: W1 widened over the identity half (zero cols), W3/b3 widened to 2*D rows
    # so identity dims get s=t=0 inside the kernel (no concatenation / select anywhere).
    def pack_coupling(W1, W3, b3):
        W1t = W1.T                                            # (H, D1[+CE])
        W1x = jnp.zeros((H, D), f32).at[:, :D1].set(W1t[:, :D1])
        W3t = W3.T                                            # (2*D2, H)
        W3p = jnp.zeros((2 * D, H), f32)
        W3p = W3p.at[D1:D, :].set(W3t[:D2, :]).at[D + D1:, :].set(W3t[D2:, :])
        b3p = jnp.zeros((2 * D,), f32)
        b3p = b3p.at[D1:D].set(b3[:D2]).at[D + D1:].set(b3[D2:])
        return W1x, W3p, b3p

    c0_W1x, c0_W3p, c0_b3p = pack_coupling(p["c0_W1"], p["c0_W3"], p["c0_b3"])
    c1_W1x, c1_W3p, c1_b3p = pack_coupling(p["c1_W1"], p["c1_W3"], p["c1_b3"])

    wc1x = jnp.stack([c0_W1x, c1_W1x])                        # (2, H, D)
    wcmid = jnp.stack([p["c0_W2"].T, p["c1_W2"].T])           # (2, H, H)
    wcout = jnp.stack([c0_W3p, c1_W3p])                       # (2, 2D, H)

    # Remaining biases, pre-broadcast over lanes -> every in-kernel add is a full-vreg op.
    # (coupling1's first-layer bias lives in the mixture table since the mask sums to 1.)
    bias_slab = jnp.concatenate([bcast(p["c0_b1"]), bcast(p["c0_b2"]), bcast(c0_b3p),
                                 bcast(p["c1_b2"]), bcast(c1_b3p)], axis=0)     # (3H+4D, TB)

    return [an_slab, vorA, vorq, mixtab, wc1x, wcmid, wcout, bias_slab]


# ----------------------------- pure-JAX reference (for verification) -----------------------------
def forward_reference(x, p, logp=None):
    return_logp = logp is not None
    if logp is None:
        logp = jnp.zeros((x.shape[0], 1), x.dtype)

    def mlp(h, W1, b1, W2, b2, W3, b3):
        h = _gelu(h @ W1 + b1)
        h = _gelu(h @ W2 + b2)
        return h @ W3 + b3

    def actnorm(x, logp, w, b):
        return (x + b) * jnp.exp(w), logp - jnp.sum(w)

    def coupling(x, logp, cond, W1, b1, W2, b2, W3, b3):
        x1, x2 = x[:, :D1], x[:, D1:]
        h = x1 if cond is None else jnp.concatenate([x1, cond], axis=-1)
        out = mlp(h, W1, b1, W2, b2, W3, b3)
        s = jnp.tanh(out[:, :D2]); t = out[:, D2:]
        y2 = x2 * jnp.exp(s) + t
        return jnp.concatenate([x1, y2], axis=-1), logp - jnp.sum(s, -1, keepdims=True)

    def condaffine(x, logp, cond, W1, b1, W2, b2, W3, b3):
        out = mlp(cond, W1, b1, W2, b2, W3, b3)
        s, t = out[:, :D], out[:, D:]
        return x * jnp.exp(s) + t, logp - jnp.sum(s, -1, keepdims=True)

    x, logp = actnorm(x, logp, p["an0_w"], p["an0_b"])
    x, logp = coupling(x, logp, None, p["c0_W1"], p["c0_b1"], p["c0_W2"], p["c0_b2"],
                       p["c0_W3"], p["c0_b3"])
    x, logp = actnorm(x, logp, p["an1_w"], p["an1_b"])

    A = p["anchors"]
    d2 = jnp.sum(x * x, -1, keepdims=True) - 2.0 * x @ A.T + jnp.sum(A * A, -1)[None, :]
    idx = jnp.argmin(d2, axis=-1)
    cond = p["embed"][idx] / math.sqrt(CE)

    x, logp = actnorm(x, logp, p["an2_w"], p["an2_b"])
    x, logp = condaffine(x, logp, cond, p["ca1_W1"], p["ca1_b1"], p["ca1_W2"], p["ca1_b2"],
                         p["ca1_W3"], p["ca1_b3"])
    x, logp = coupling(x, logp, cond, p["c1_W1"], p["c1_b1"], p["c1_W2"], p["c1_b2"],
                       p["c1_W3"], p["c1_b3"])
    x, logp = actnorm(x, logp, p["an3_w"], p["an3_b"])
    x, logp = condaffine(x, logp, cond, p["ca2_W1"], p["ca2_b1"], p["ca2_W2"], p["ca2_b2"],
                         p["ca2_W3"], p["ca2_b3"])
    return (x, logp) if return_logp else x


# ----------------------------- main -----------------------------
if __name__ == "__main__":
    B = 256   # 2 lane tiles -> both v7x TensorCores busy; big lane-dense tiles on v5e/v6e
    x = jax.random.normal(jax.random.PRNGKey(0), (B, D), dtype=jnp.float32)
    raw = init_raw_params(jax.random.PRNGKey(42))
    packed = pack_params(raw)

    # forward(x)          -> returns x only (logp=None path)
    z = voronoi_mixture_forward(x, packed)
    # forward(x, logp=..) -> returns (x, logp)
    z2, logp = voronoi_mixture_forward(x, packed, logp=jnp.zeros((B, 1), jnp.float32))
    jax.block_until_ready((z, z2, logp))

    zr, lpr = forward_reference(x, raw, logp=jnp.zeros((B, 1), jnp.float32))

    assert z.shape == (B, D) and logp.shape == (B, 1)
    assert bool(jnp.all(jnp.isfinite(z))) and bool(jnp.all(jnp.isfinite(logp)))
    assert bool(jnp.allclose(z, z2))
    assert bool(jnp.allclose(z, zr, rtol=1e-3, atol=1e-3)), float(jnp.max(jnp.abs(z - zr)))
    assert bool(jnp.allclose(logp, lpr, rtol=1e-3, atol=1e-3)), float(jnp.max(jnp.abs(logp - lpr)))
    print("KERNEL_OK")
</pallas_src>

<mosaic_0001>
module attributes {stable_mosaic.version = 11 : i64} {
  func.func @_vmm_kernel(%arg0: i32, %arg1: memref<8x128xf32, #tpu.memory_space<vmem>>, %arg2: memref<1x128xf32, #tpu.memory_space<vmem>>, %arg3: memref<32x128xf32, #tpu.memory_space<vmem>>, %arg4: memref<4x8xf32, #tpu.memory_space<vmem>>, %arg5: memref<4x128xf32, #tpu.memory_space<vmem>>, %arg6: memref<65x4xf32, #tpu.memory_space<vmem>>, %arg7: memref<2x32x8xf32, #tpu.memory_space<vmem>>, %arg8: memref<2x32x32xf32, #tpu.memory_space<vmem>>, %arg9: memref<2x16x32xf32, #tpu.memory_space<vmem>>, %arg10: memref<128x128xf32, #tpu.memory_space<vmem>>, %arg11: memref<8x128xf32, #tpu.memory_space<vmem>>, %arg12: memref<1x128xf32, #tpu.memory_space<vmem>>) attributes {dimension_semantics = [#tpu.dimension_semantics<parallel>], iteration_bounds = array<i64: 2>, scalar_prefetch = 0 : i64, scratch_operands = 0 : i64, tpu.core_type = #tpu.core_type<tc>, window_params = [{transform_indices = @transform_0, window_bounds = array<i64: 8, 128>}, {transform_indices = @transform_1, window_bounds = array<i64: 1, 128>}, {pipeline_mode = #tpu.pipeline_mode<synchronous>, transform_indices = @transform_2, window_bounds = array<i64: 32, 128>}, {pipeline_mode = #tpu.pipeline_mode<synchronous>, transform_indices = @transform_3, window_bounds = array<i64: 4, 8>}, {pipeline_mode = #tpu.pipeline_mode<synchronous>, transform_indices = @transform_4, window_bounds = array<i64: 4, 128>}, {pipeline_mode = #tpu.pipeline_mode<synchronous>, transform_indices = @transform_5, window_bounds = array<i64: 65, 4>}, {pipeline_mode = #tpu.pipeline_mode<synchronous>, transform_indices = @transform_6, window_bounds = array<i64: 2, 32, 8>}, {pipeline_mode = #tpu.pipeline_mode<synchronous>, transform_indices = @transform_7, window_bounds = array<i64: 2, 32, 32>}, {pipeline_mode = #tpu.pipeline_mode<synchronous>, transform_indices = @transform_8, window_bounds = array<i64: 2, 16, 32>}, {pipeline_mode = #tpu.pipeline_mode<synchronous>, transform_indices = @transform_9, window_bounds = array<i64: 128, 128>}, {transform_indices = @transform_10, window_bounds = array<i64: 8, 128>}, {transform_indices = @transform_11, window_bounds = array<i64: 1, 128>}]} {
    %c0 = arith.constant 0 : index
    %c0_0 = arith.constant 0 : index
    %0 = vector.load %arg1[%c0, %c0_0] : memref<8x128xf32, #tpu.memory_space<vmem>>, vector<8x128xf32>
    %c0_1 = arith.constant 0 : index
    %c0_2 = arith.constant 0 : index
    %1 = vector.load %arg2[%c0_1, %c0_2] : memref<1x128xf32, #tpu.memory_space<vmem>>, vector<1x128xf32>
    %c0_3 = arith.constant 0 : index
    %c0_4 = arith.constant 0 : index
    %2 = vector.load %arg3[%c0_3, %c0_4] : memref<32x128xf32, #tpu.memory_space<vmem>>, vector<32x128xf32>
    %c0_5 = arith.constant 0 : index
    %c0_6 = arith.constant 0 : index
    %3 = vector.load %arg10[%c0_5, %c0_6] : memref<128x128xf32, #tpu.memory_space<vmem>>, vector<128x128xf32>
    %4 = vector.extract_strided_slice %2 {offsets = [0, 0], sizes = [8, 128], strides = [1, 1]} : vector<32x128xf32> to vector<8x128xf32>
    %5 = arith.mulf %0, %4 : vector<8x128xf32>
    %6 = vector.extract_strided_slice %2 {offsets = [8, 0], sizes = [8, 128], strides = [1, 1]} : vector<32x128xf32> to vector<8x128xf32>
    %7 = arith.addf %5, %6 : vector<8x128xf32>
    %8 = vector.extract_strided_slice %3 {offsets = [0, 0], sizes = [32, 128], strides = [1, 1]} : vector<128x128xf32> to vector<32x128xf32>
    %c0_7 = arith.constant 0 : index
    %c0_8 = arith.constant 0 : index
    %c0_9 = arith.constant 0 : index
    %9 = vector.load %arg7[%c0_7, %c0_8, %c0_9] : memref<2x32x8xf32, #tpu.memory_space<vmem>>, vector<1x32x8xf32>
    %10 = vector.shape_cast %9 : vector<1x32x8xf32> to vector<32x8xf32>
    %c0_10 = arith.constant 0 : index
    %c0_11 = arith.constant 0 : index
    %c0_12 = arith.constant 0 : index
    %11 = vector.load %arg8[%c0_10, %c0_11, %c0_12] : memref<2x32x32xf32, #tpu.memory_space<vmem>>, vector<1x32x32xf32>
    %12 = vector.shape_cast %11 : vector<1x32x32xf32> to vector<32x32xf32>
    %13 = vector.extract_strided_slice %3 {offsets = [32, 0], sizes = [32, 128], strides = [1, 1]} : vector<128x128xf32> to vector<32x128xf32>
    %c0_13 = arith.constant 0 : index
    %c0_14 = arith.constant 0 : index
    %c0_15 = arith.constant 0 : index
    %14 = vector.load %arg9[%c0_13, %c0_14, %c0_15] : memref<2x16x32xf32, #tpu.memory_space<vmem>>, vector<1x16x32xf32>
    %15 = vector.shape_cast %14 : vector<1x16x32xf32> to vector<16x32xf32>
    %16 = vector.extract_strided_slice %3 {offsets = [64, 0], sizes = [16, 128], strides = [1, 1]} : vector<128x128xf32> to vector<16x128xf32>
    %cst = arith.constant dense<0.000000e+00> : vector<32x128xf32>
    %17 = tpu.matmul %10, %7, %cst {dimension_numbers = #tpu.dot_dimension_numbers<[1], [0], [0], [1], [0, 0, 1, 1], [], []>} : vector<32x8xf32>, vector<8x128xf32>, vector<32x128xf32> -> vector<32x128xf32>
    %18 = arith.addf %17, %8 : vector<32x128xf32>
    %cst_16 = arith.constant 5.000000e-01 : f32
    %19 = vector.broadcast %cst_16 : f32 to vector<32x128xf32>
    %20 = arith.mulf %19, %18 : vector<32x128xf32>
    %cst_17 = arith.constant 4.471500e-02 : f32
    %21 = vector.broadcast %cst_17 : f32 to vector<32x128xf32>
    %22 = arith.mulf %21, %18 : vector<32x128xf32>
    %23 = arith.mulf %22, %18 : vector<32x128xf32>
    %24 = arith.mulf %23, %18 : vector<32x128xf32>
    %25 = arith.addf %18, %24 : vector<32x128xf32>
    %cst_18 = arith.constant 0.797884583 : f32
    %26 = vector.broadcast %cst_18 : f32 to vector<32x128xf32>
    %27 = arith.mulf %26, %25 : vector<32x128xf32>
    %28 = math.tanh %27 : vector<32x128xf32>
    %cst_19 = arith.constant 1.000000e+00 : f32
    %29 = vector.broadcast %cst_19 : f32 to vector<32x128xf32>
    %30 = arith.addf %29, %28 : vector<32x128xf32>
    %31 = arith.mulf %20, %30 : vector<32x128xf32>
    %cst_20 = arith.constant dense<0.000000e+00> : vector<32x128xf32>
    %32 = tpu.matmul %12, %31, %cst_20 {dimension_numbers = #tpu.dot_dimension_numbers<[1], [0], [0], [1], [0, 0, 1, 1], [], []>} : vector<32x32xf32>, vector<32x128xf32>, vector<32x128xf32> -> vector<32x128xf32>
    %33 = arith.addf %32, %13 : vector<32x128xf32>
    %cst_21 = arith.constant 5.000000e-01 : f32
    %34 = vector.broadcast %cst_21 : f32 to vector<32x128xf32>
    %35 = arith.mulf %34, %33 : vector<32x128xf32>
    %cst_22 = arith.constant 4.471500e-02 : f32
    %36 = vector.broadcast %cst_22 : f32 to vector<32x128xf32>
    %37 = arith.mulf %36, %33 : vector<32x128xf32>
    %38 = arith.mulf %37, %33 : vector<32x128xf32>
    %39 = arith.mulf %38, %33 : vector<32x128xf32>
    %40 = arith.addf %33, %39 : vector<32x128xf32>
    %cst_23 = arith.constant 0.797884583 : f32
    %41 = vector.broadcast %cst_23 : f32 to vector<32x128xf32>
    %42 = arith.mulf %41, %40 : vector<32x128xf32>
    %43 = math.tanh %42 : vector<32x128xf32>
    %cst_24 = arith.constant 1.000000e+00 : f32
    %44 = vector.broadcast %cst_24 : f32 to vector<32x128xf32>
    %45 = arith.addf %44, %43 : vector<32x128xf32>
    %46 = arith.mulf %35, %45 : vector<32x128xf32>
    %cst_25 = arith.constant dense<0.000000e+00> : vector<16x128xf32>
    %47 = tpu.matmul %15, %46, %cst_25 {dimension_numbers = #tpu.dot_dimension_numbers<[1], [0], [0], [1], [0, 0, 1, 1], [], []>} : vector<16x32xf32>, vector<32x128xf32>, vector<16x128xf32> -> vector<16x128xf32>
    %48 = arith.addf %47, %16 : vector<16x128xf32>
    %49 = vector.extract_strided_slice %48 {offsets = [0, 0], sizes = [8, 128], strides = [1, 1]} : vector<16x128xf32> to vector<8x128xf32>
    %50 = math.tanh %49 : vector<8x128xf32>
    %51 = vector.extract_strided_slice %48 {offsets = [8, 0], sizes = [8, 128], strides = [1, 1]} : vector<16x128xf32> to vector<8x128xf32>
    %52 = math.exp %50 : vector<8x128xf32>
    %53 = arith.mulf %7, %52 : vector<8x128xf32>
    %54 = arith.addf %53, %51 : vector<8x128xf32>
    %cst_26 = arith.constant dense<0.000000e+00> : vector<128xf32>
    %55 = vector.multi_reduction <add>, %50, %cst_26 [0] : vector<8x128xf32> to vector<128xf32>
    %56 = vector.shape_cast %55 : vector<128xf32> to vector<1x128xf32>
    %57 = arith.subf %1, %56 : vector<1x128xf32>
    %58 = vector.extract_strided_slice %2 {offsets = [16, 0], sizes = [8, 128], strides = [1, 1]} : vector<32x128xf32> to vector<8x128xf32>
    %59 = arith.mulf %54, %58 : vector<8x128xf32>
    %60 = vector.extract_strided_slice %2 {offsets = [24, 0], sizes = [8, 128], strides = [1, 1]} : vector<32x128xf32> to vector<8x128xf32>
    %61 = arith.addf %59, %60 : vector<8x128xf32>
    %c0_27 = arith.constant 0 : index
    %c0_28 = arith.constant 0 : index
    %62 = vector.load %arg4[%c0_27, %c0_28] : memref<4x8xf32, #tpu.memory_space<vmem>>, vector<4x8xf32>
    %cst_29 = arith.constant dense<0.000000e+00> : vector<4x128xf32>
    %63 = tpu.matmul %62, %61, %cst_29 {dimension_numbers = #tpu.dot_dimension_numbers<[1], [0], [0], [1], [0, 0, 1, 1], [], []>} : vector<4x8xf32>, vector<8x128xf32>, vector<4x128xf32> -> vector<4x128xf32>
    %c0_30 = arith.constant 0 : index
    %c0_31 = arith.constant 0 : index
    %64 = vector.load %arg5[%c0_30, %c0_31] : memref<4x128xf32, #tpu.memory_space<vmem>>, vector<4x128xf32>
    %65 = arith.addf %63, %64 : vector<4x128xf32>
    %cst_32 = arith.constant dense<0x7F800000> : vector<128xf32>
    %66 = vector.multi_reduction <minimumf>, %65, %cst_32 [0] : vector<4x128xf32> to vector<128xf32>
    %67 = vector.shape_cast %66 : vector<128xf32> to vector<1x128xf32>
    %68 = tpu.iota {dimensions = array<i32: 0>} : vector<4x128xi32>
    %69 = vector.broadcast %67 : vector<1x128xf32> to vector<4x128xf32>
    %70 = arith.cmpf ole, %65, %69 : vector<4x128xf32>
    %c4_i32 = arith.constant 4 : i32
    %71 = vector.broadcast %c4_i32 : i32 to vector<4x128xi32>
    %72 = arith.select %70, %68, %71 : vector<4x128xi1>, vector<4x128xi32>
    %cst_33 = arith.constant dense<2147483647> : vector<128xi32>
    %73 = vector.multi_reduction <minsi>, %72, %cst_33 [0] : vector<4x128xi32> to vector<128xi32>
    %74 = vector.shape_cast %73 : vector<128xi32> to vector<1x128xi32>
    %75 = vector.broadcast %74 : vector<1x128xi32> to vector<4x128xi32>
    %76 = arith.cmpi eq, %68, %75 : vector<4x128xi32>
    %77 = arith.extui %76 : vector<4x128xi1> to vector<4x128xi32>
    %78 = arith.sitofp %77 : vector<4x128xi32> to vector<4x128xf32>
    %c0_34 = arith.constant 0 : index
    %c0_35 = arith.constant 0 : index
    %79 = vector.load %arg6[%c0_34, %c0_35] : memref<65x4xf32, #tpu.memory_space<vmem>>, vector<65x4xf32>
    %cst_36 = arith.constant dense<0.000000e+00> : vector<65x128xf32>
    %80 = tpu.matmul %79, %78, %cst_36 {dimension_numbers = #tpu.dot_dimension_numbers<[1], [0], [0], [1], [0, 0, 1, 1], [], []>} : vector<65x4xf32>, vector<4x128xf32>, vector<65x128xf32> -> vector<65x128xf32>
    %81 = vector.extract_strided_slice %80 {offsets = [0, 0], sizes = [32, 128], strides = [1, 1]} : vector<65x128xf32> to vector<32x128xf32>
    %82 = vector.extract_strided_slice %80 {offsets = [32, 0], sizes = [8, 128], strides = [1, 1]} : vector<65x128xf32> to vector<8x128xf32>
    %83 = vector.extract_strided_slice %80 {offsets = [40, 0], sizes = [8, 128], strides = [1, 1]} : vector<65x128xf32> to vector<8x128xf32>
    %84 = vector.extract_strided_slice %80 {offsets = [48, 0], sizes = [8, 128], strides = [1, 1]} : vector<65x128xf32> to vector<8x128xf32>
    %85 = vector.extract_strided_slice %80 {offsets = [56, 0], sizes = [8, 128], strides = [1, 1]} : vector<65x128xf32> to vector<8x128xf32>
    %86 = vector.extract_strided_slice %80 {offsets = [64, 0], sizes = [1, 128], strides = [1, 1]} : vector<65x128xf32> to vector<1x128xf32>
    %87 = arith.mulf %61, %82 : vector<8x128xf32>
    %88 = arith.addf %87, %83 : vector<8x128xf32>
    %c1 = arith.constant 1 : index
    %c0_37 = arith.constant 0 : index
    %c0_38 = arith.constant 0 : index
    %89 = vector.load %arg7[%c1, %c0_37, %c0_38] : memref<2x32x8xf32, #tpu.memory_space<vmem>>, vector<1x32x8xf32>
    %90 = vector.shape_cast %89 : vector<1x32x8xf32> to vector<32x8xf32>
    %c1_39 = arith.constant 1 : index
    %c0_40 = arith.constant 0 : index
    %c0_41 = arith.constant 0 : index
    %91 = vector.load %arg8[%c1_39, %c0_40, %c0_41] : memref<2x32x32xf32, #tpu.memory_space<vmem>>, vector<1x32x32xf32>
    %92 = vector.shape_cast %91 : vector<1x32x32xf32> to vector<32x32xf32>
    %93 = vector.extract_strided_slice %3 {offsets = [80, 0], sizes = [32, 128], strides = [1, 1]} : vector<128x128xf32> to vector<32x128xf32>
    %c1_42 = arith.constant 1 : index
    %c0_43 = arith.constant 0 : index
    %c0_44 = arith.constant 0 : index
    %94 = vector.load %arg9[%c1_42, %c0_43, %c0_44] : memref<2x16x32xf32, #tpu.memory_space<vmem>>, vector<1x16x32xf32>
    %95 = vector.shape_cast %94 : vector<1x16x32xf32> to vector<16x32xf32>
    %96 = vector.extract_strided_slice %3 {offsets = [112, 0], sizes = [16, 128], strides = [1, 1]} : vector<128x128xf32> to vector<16x128xf32>
    %cst_45 = arith.constant dense<0.000000e+00> : vector<32x128xf32>
    %97 = tpu.matmul %90, %88, %cst_45 {dimension_numbers = #tpu.dot_dimension_numbers<[1], [0], [0], [1], [0, 0, 1, 1], [], []>} : vector<32x8xf32>, vector<8x128xf32>, vector<32x128xf32> -> vector<32x128xf32>
    %98 = arith.addf %97, %81 : vector<32x128xf32>
    %cst_46 = arith.constant 5.000000e-01 : f32
    %99 = vector.broadcast %cst_46 : f32 to vector<32x128xf32>
    %100 = arith.mulf %99, %98 : vector<32x128xf32>
    %cst_47 = arith.constant 4.471500e-02 : f32
    %101 = vector.broadcast %cst_47 : f32 to vector<32x128xf32>
    %102 = arith.mulf %101, %98 : vector<32x128xf32>
    %103 = arith.mulf %102, %98 : vector<32x128xf32>
    %104 = arith.mulf %103, %98 : vector<32x128xf32>
    %105 = arith.addf %98, %104 : vector<32x128xf32>
    %cst_48 = arith.constant 0.797884583 : f32
    %106 = vector.broadcast %cst_48 : f32 to vector<32x128xf32>
    %107 = arith.mulf %106, %105 : vector<32x128xf32>
    %108 = math.tanh %107 : vector<32x128xf32>
    %cst_49 = arith.constant 1.000000e+00 : f32
    %109 = vector.broadcast %cst_49 : f32 to vector<32x128xf32>
    %110 = arith.addf %109, %108 : vector<32x128xf32>
    %111 = arith.mulf %100, %110 : vector<32x128xf32>
    %cst_50 = arith.constant dense<0.000000e+00> : vector<32x128xf32>
    %112 = tpu.matmul %92, %111, %cst_50 {dimension_numbers = #tpu.dot_dimension_numbers<[1], [0], [0], [1], [0, 0, 1, 1], [], []>} : vector<32x32xf32>, vector<32x128xf32>, vector<32x128xf32> -> vector<32x128xf32>
    %113 = arith.addf %112, %93 : vector<32x128xf32>
    %cst_51 = arith.constant 5.000000e-01 : f32
    %114 = vector.broadcast %cst_51 : f32 to vector<32x128xf32>
    %115 = arith.mulf %114, %113 : vector<32x128xf32>
    %cst_52 = arith.constant 4.471500e-02 : f32
    %116 = vector.broadcast %cst_52 : f32 to vector<32x128xf32>
    %117 = arith.mulf %116, %113 : vector<32x128xf32>
    %118 = arith.mulf %117, %113 : vector<32x128xf32>
    %119 = arith.mulf %118, %113 : vector<32x128xf32>
    %120 = arith.addf %113, %119 : vector<32x128xf32>
    %cst_53 = arith.constant 0.797884583 : f32
    %121 = vector.broadcast %cst_53 : f32 to vector<32x128xf32>
    %122 = arith.mulf %121, %120 : vector<32x128xf32>
    %123 = math.tanh %122 : vector<32x128xf32>
    %cst_54 = arith.constant 1.000000e+00 : f32
    %124 = vector.broadcast %cst_54 : f32 to vector<32x128xf32>
    %125 = arith.addf %124, %123 : vector<32x128xf32>
    %126 = arith.mulf %115, %125 : vector<32x128xf32>
    %cst_55 = arith.constant dense<0.000000e+00> : vector<16x128xf32>
    %127 = tpu.matmul %95, %126, %cst_55 {dimension_numbers = #tpu.dot_dimension_numbers<[1], [0], [0], [1], [0, 0, 1, 1], [], []>} : vector<16x32xf32>, vector<32x128xf32>, vector<16x128xf32> -> vector<16x128xf32>
    %128 = arith.addf %127, %96 : vector<16x128xf32>
    %129 = vector.extract_strided_slice %128 {offsets = [0, 0], sizes = [8, 128], strides = [1, 1]} : vector<16x128xf32> to vector<8x128xf32>
    %130 = math.tanh %129 : vector<8x128xf32>
    %131 = vector.extract_strided_slice %128 {offsets = [8, 0], sizes = [8, 128], strides = [1, 1]} : vector<16x128xf32> to vector<8x128xf32>
    %132 = math.exp %130 : vector<8x128xf32>
    %133 = arith.mulf %88, %132 : vector<8x128xf32>
    %134 = arith.addf %133, %131 : vector<8x128xf32>
    %cst_56 = arith.constant dense<0.000000e+00> : vector<128xf32>
    %135 = vector.multi_reduction <add>, %130, %cst_56 [0] : vector<8x128xf32> to vector<128xf32>
    %136 = vector.shape_cast %135 : vector<128xf32> to vector<1x128xf32>
    %137 = arith.subf %57, %136 : vector<1x128xf32>
    %138 = arith.mulf %134, %84 : vector<8x128xf32>
    %139 = arith.addf %138, %85 : vector<8x128xf32>
    %140 = arith.subf %137, %86 : vector<1x128xf32>
    %c0_57 = arith.constant 0 : index
    %c0_58 = arith.constant 0 : index
    %141 = vector.load %arg11[%c0_57, %c0_58] : memref<8x128xf32, #tpu.memory_space<vmem>>, vector<8x128xf32>
    tpu.vector_store %arg11[%c0_57, %c0_58], %139 {strides = array<i32>} : memref<8x128xf32, #tpu.memory_space<vmem>>, vector<8x128xf32>,
    %c0_59 = arith.constant 0 : index
    %c0_60 = arith.constant 0 : index
    %142 = vector.load %arg12[%c0_59, %c0_60] : memref<1x128xf32, #tpu.memory_space<vmem>>, vector<1x128xf32>
    tpu.vector_store %arg12[%c0_59, %c0_60], %140 {strides = array<i32>} : memref<1x128xf32, #tpu.memory_space<vmem>>, vector<1x128xf32>,
    return
  }
  func.func @transform_0(%arg0: i32) -> (i32, i32) {
    %c0_i32 = arith.constant 0 : i32
    %c0_i32_0 = arith.constant 0 : i32
    return %c0_i32, %arg0 : i32, i32
  }
  func.func @transform_1(%arg0: i32) -> (i32, i32) {
    %c0_i32 = arith.constant 0 : i32
    %c0_i32_0 = arith.constant 0 : i32
    return %c0_i32, %arg0 : i32, i32
  }
  func.func @transform_2(%arg0: i32) -> (i32, i32) {
    %c0_i32 = arith.constant 0 : i32
    %c0_i32_0 = arith.constant 0 : i32
    %c0_i32_1 = arith.constant 0 : i32
    return %c0_i32, %c0_i32_0 : i32, i32
  }
  func.func @transform_3(%arg0: i32) -> (i32, i32) {
    %c0_i32 = arith.constant 0 : i32
    %c0_i32_0 = arith.constant 0 : i32
    %c0_i32_1 = arith.constant 0 : i32
    return %c0_i32, %c0_i32_0 : i32, i32
  }
  func.func @transform_4(%arg0: i32) -> (i32, i32) {
    %c0_i32 = arith.constant 0 : i32
    %c0_i32_0 = arith.constant 0 : i32
    %c0_i32_1 = arith.constant 0 : i32
    return %c0_i32, %c0_i32_0 : i32, i32
  }
  func.func @transform_5(%arg0: i32) -> (i32, i32) {
    %c0_i32 = arith.constant 0 : i32
    %c0_i32_0 = arith.constant 0 : i32
    %c0_i32_1 = arith.constant 0 : i32
    return %c0_i32, %c0_i32_0 : i32, i32
  }
  func.func @transform_6(%arg0: i32) -> (i32, i32, i32) {
    %c0_i32 = arith.constant 0 : i32
    %c0_i32_0 = arith.constant 0 : i32
    %c0_i32_1 = arith.constant 0 : i32
    %c0_i32_2 = arith.constant 0 : i32
    return %c0_i32, %c0_i32_0, %c0_i32_1 : i32, i32, i32
  }
  func.func @transform_7(%arg0: i32) -> (i32, i32, i32) {
    %c0_i32 = arith.constant 0 : i32
    %c0_i32_0 = arith.constant 0 : i32
    %c0_i32_1 = arith.constant 0 : i32
    %c0_i32_2 = arith.constant 0 : i32
    return %c0_i32, %c0_i32_0, %c0_i32_1 : i32, i32, i32
  }
  func.func @transform_8(%arg0: i32) -> (i32, i32, i32) {
    %c0_i32 = arith.constant 0 : i32
    %c0_i32_0 = arith.constant 0 : i32
    %c0_i32_1 = arith.constant 0 : i32
    %c0_i32_2 = arith.constant 0 : i32
    return %c0_i32, %c0_i32_0, %c0_i32_1 : i32, i32, i32
  }
  func.func @transform_9(%arg0: i32) -> (i32, i32) {
    %c0_i32 = arith.constant 0 : i32
    %c0_i32_0 = arith.constant 0 : i32
    %c0_i32_1 = arith.constant 0 : i32
    return %c0_i32, %c0_i32_0 : i32, i32
  }
  func.func @transform_10(%arg0: i32) -> (i32, i32) {
    %c0_i32 = arith.constant 0 : i32
    %c0_i32_0 = arith.constant 0 : i32
    return %c0_i32, %arg0 : i32, i32
  }
  func.func @transform_11(%arg0: i32) -> (i32, i32) {
    %c0_i32 = arith.constant 0 : i32
    %c0_i32_0 = arith.constant 0 : i32
    return %c0_i32, %arg0 : i32, i32
  }
}

</mosaic_0001>

<llo_original>
// kernel: tpu_custom_call.1
$region0: #{tpu_custom_call.1}
  #allocation0 [shape = 'u32[]', space=smem, size = 0x4, offset = 0x4, fixed_abs, tag = 'smem constant byte address 0x4 - core index']
  #allocation1 [shape = 'u32[144,128]{1,0:T(1,128)}', space=vmem, size = 0x12000, scoped, tag = 'internal scratch']
  %s0 = inlined_call_operand.hbm [shape: f32[8,256], index: 0, kind: input, shape index: {}]
  %s1 = inlined_call_operand.vmem [shape: f32[1,256], index: 1, kind: input, shape index: {}]
  %s2 = inlined_call_operand.vmem [shape: f32[32,128], index: 2, kind: input, shape index: {}]
  %s3 = inlined_call_operand.vmem [shape: f32[4,8], index: 3, kind: input, shape index: {}]
  %s4 = inlined_call_operand.vmem [shape: f32[4,128], index: 4, kind: input, shape index: {}]
  %s5 = inlined_call_operand.vmem [shape: f32[65,4], index: 5, kind: input, shape index: {}]
  %s6 = inlined_call_operand.vmem [shape: f32[2,32,8], index: 6, kind: input, shape index: {}]
  %s7 = inlined_call_operand.hbm [shape: f32[2,32,32], index: 7, kind: input, shape index: {}]
  %s8 = inlined_call_operand.hbm [shape: f32[2,16,32], index: 8, kind: input, shape index: {}]
  %s9 = inlined_call_operand.vmem [shape: f32[128,128], index: 9, kind: input, shape index: {}]
  %s10 = inlined_call_operand.hbm [shape: f32[8,256], index: 10, kind: output, shape index: {0}]
  %s11 = inlined_call_operand.hbm [shape: f32[1,256], index: 11, kind: output, shape index: {1}]
  %12 = xla_tuple %s10, %s11
  %s13 = sld [smem:[#allocation0]]
  $region93: #{tpu_custom_call.1} parent=0
    _
  %s15 = ssub.s32 1, %s13
  %s16 = scalar_select 0, %s15, %s13
  $region1: #{tpu_custom_call.1} parent=0
    #allocation2 [shape = 'u8[8192]{0}', space=vmem, size = 0x2000, scoped, tag = 'input window, operand 0']
    #allocation3 [shape = 's32[2]{0}', space=sflag, size = 0x8, scoped, tag = 'scoped memory for tpu_custom_call.1']
    #allocation4 [shape = 's32[2]{0}', space=sflag, size = 0x8, scoped, tag = 'scoped memory for tpu_custom_call.1']
    #allocation5 [shape = 'u8[32768]{0}', space=vmem, size = 0x8000, scoped, tag = 'input window, operand 7, single buffered']
    #allocation6 [shape = 's32[1]{0}', space=sflag, size = 0x4, scoped, tag = 'scoped memory for tpu_custom_call.1']
    #allocation7 [shape = 'u8[16384]{0}', space=vmem, size = 0x4000, scoped, tag = 'input window, operand 8, single buffered']
    #allocation8 [shape = 'u8[8192]{0}', space=vmem, size = 0x2000, scoped, tag = 'output window, operand 0']
    #allocation9 [shape = 'u8[1024]{0}', space=vmem, size = 0x400, scoped, tag = 'output window, operand 1']
    #allocation10 [shape = 's32[2]{0}', space=sflag, size = 0x8, scoped, tag = 'scoped memory for tpu_custom_call.1']
    %17 = vsyncpa [#allocation3], 0
    %s18 = scalar_lea.sflag [#allocation3], 1
    %19 = vsyncpa %s18, 0
    %20 = vsyncpa [#allocation6], 0
    %21 = vsyncpa [#allocation4], 0
    %s22 = scalar_lea.sflag [#allocation4], 1
    %23 = vsyncpa %s22, 0
    %24 = vsyncpa [#allocation10], 0
    %s25 = scalar_lea.sflag [#allocation10], 1
    %26 = vsyncpa %s25, 0
    loop: start=0, step=1, limit=4
    $region2: #{tpu_custom_call.1} parent=1 // loop_pre_header
      _
    $region3: #{tpu_custom_call.1} parent=1 // loop_header
      %s28 = sphi 0, %s32
      %p29 = scmp.ge.s32.totalorder %s28, 4
      %s38 = sphi 0, %s40
      %s41 = sphi 0, %s38
      %s42 = sphi 0, %s41
      %s58 = sphi 0, %s42
      %s64 = sphi 0, %s66
      %s67 = sphi 0, %s64
      %s68 = sphi 0, %s67
      %s84 = sphi 0, %s68
      %s88 = sphi 0, %s88
      %s90 = sphi 0, %s88
      %s91 = sphi 0, %s90
      %s105 = sphi 0, %s91
      %s109 = sphi 0, %s109
      %s111 = sphi 0, %s109
      %s112 = sphi 0, %s111
      %s126 = sphi 0, %s112
      %s130 = sphi 0, %s130
      %s132 = sphi 0, %s130
      %s133 = sphi 0, %s132
      %s147 = sphi 0, %s133
      %s151 = sphi 0, %s151
      %s153 = sphi 0, %s151
      %s154 = sphi 0, %s153
      %s168 = sphi 0, %s154
      %s172 = sphi 0, %s172
      %s174 = sphi 0, %s172
      %s175 = sphi 0, %s174
      %s189 = sphi 0, %s175
      %s193 = sphi 0, %s193
      %s195 = sphi 0, %s193
      %s196 = sphi 0, %s195
      %s210 = sphi 0, %s196
      %s214 = sphi 0, %s214
      %s216 = sphi 0, %s214
      %s217 = sphi 0, %s216
      %s231 = sphi 0, %s217
      %s235 = sphi 0, %s235
      %s237 = sphi 0, %s235
      %s238 = sphi 0, %s237
      %s252 = sphi 0, %s238
      %s258 = sphi 0, %s260
      %s261 = sphi 0, %s258
      %s262 = sphi 0, %s261
      %s278 = sphi 0, %s262
      %s284 = sphi 0, %s286
      %s287 = sphi 0, %s284
      %s288 = sphi 0, %s287
      %s304 = sphi 0, %s288
    $region4: #{tpu_custom_call.1} parent=1 // loop_header_branch
      %31 = sbr.rel (%p29) target = $region8
    $region5: #{tpu_custom_call.1} parent=1 // loop_body
      %s33 = ssub.s32 %s28, 1
      %s34 = ssub.s32 %s28, 2
      %s35 = sadd.s32 %s28, 1
      %s36 = ssub.s32 %s28, %s35
      %p37 = scmp.eq.s32.totalorder %s36, 0
      %s39 = sadd.s32 %s38, 1
      %s40 = scalar_select %p37, %s38, %s39
      %p43 = pneg %p37
      %p44 = scmp.eq.s32.totalorder %s28, 1
      %p45 = por %p43, %p44
      %p46 = scmp.ne.s32.totalorder %s38, %s41
      %p47 = scmp.eq.s32.totalorder %s28, 0
      %p48 = por %p46, %p47
      %p49 = scmp.ne.s32.totalorder %s38, %s41
      %p50 = scmp.eq.s32.totalorder %s33, 1
      %p51 = por %p49, %p50
      %p52 = scmp.ne.s32.totalorder %s41, %s42
      %p53 = scmp.eq.s32.totalorder %s33, 0
      %p54 = por %p52, %p53
      %p55 = scmp.ne.s32.totalorder %s41, %s42
      %p56 = scmp.eq.s32.totalorder %s34, 1
      %p57 = por %p55, %p56
      %p59 = scmp.ne.s32.totalorder %s42, %s58
      %p60 = scmp.eq.s32.totalorder %s34, 0
      %p61 = por %p59, %p60
      %s62 = ssub.s32 %s28, %s35
      %p63 = scmp.eq.s32.totalorder %s62, 0
      %s65 = sadd.s32 %s64, 1
      %s66 = scalar_select %p63, %s64, %s65
      %p69 = pneg %p63
      %p70 = scmp.eq.s32.totalorder %s28, 1
      %p71 = por %p69, %p70
      %p72 = scmp.ne.s32.totalorder %s64, %s67
      %p73 = scmp.eq.s32.totalorder %s28, 0
      %p74 = por %p72, %p73
      %p75 = scmp.ne.s32.totalorder %s64, %s67
      %p76 = scmp.eq.s32.totalorder %s33, 1
      %p77 = por %p75, %p76
      %p78 = scmp.ne.s32.totalorder %s67, %s68
      %p79 = scmp.eq.s32.totalorder %s33, 0
      %p80 = por %p78, %p79
      %p81 = scmp.ne.s32.totalorder %s67, %s68
      %p82 = scmp.eq.s32.totalorder %s34, 1
      %p83 = por %p81, %p82
      %p85 = scmp.ne.s32.totalorder %s68, %s84
      %p86 = scmp.eq.s32.totalorder %s34, 0
      %p87 = por %p85, %p86
      %s89 = sadd.s32 %s88, 1
      %p92 = scmp.eq.s32.totalorder %s28, 1
      %p93 = scmp.ne.s32.totalorder %s88, %s90
      %p94 = scmp.eq.s32.totalorder %s28, 0
      %p95 = por %p93, %p94
      %p96 = scmp.ne.s32.totalorder %s88, %s90
      %p97 = scmp.eq.s32.totalorder %s33, 1
      %p98 = por %p96, %p97
      %p99 = scmp.ne.s32.totalorder %s90, %s91
      %p100 = scmp.eq.s32.totalorder %s33, 0
      %p101 = por %p99, %p100
      %p102 = scmp.ne.s32.totalorder %s90, %s91
      %p103 = scmp.eq.s32.totalorder %s34, 1
      %p104 = por %p102, %p103
      %p106 = scmp.ne.s32.totalorder %s91, %s105
      %p107 = scmp.eq.s32.totalorder %s34, 0
      %p108 = por %p106, %p107
      %s110 = sadd.s32 %s109, 1
      %p113 = scmp.eq.s32.totalorder %s28, 1
      %p114 = scmp.ne.s32.totalorder %s109, %s111
      %p115 = scmp.eq.s32.totalorder %s28, 0
      %p116 = por %p114, %p115
      %p117 = scmp.ne.s32.totalorder %s109, %s111
      %p118 = scmp.eq.s32.totalorder %s33, 1
      %p119 = por %p117, %p118
      %p120 = scmp.ne.s32.totalorder %s111, %s112
      %p121 = scmp.eq.s32.totalorder %s33, 0
      %p122 = por %p120, %p121
      %p123 = scmp.ne.s32.totalorder %s111, %s112
      %p124 = scmp.eq.s32.totalorder %s34, 1
      %p125 = por %p123, %p124
      %p127 = scmp.ne.s32.totalorder %s112, %s126
      %p128 = scmp.eq.s32.totalorder %s34, 0
      %p129 = por %p127, %p128
      %s131 = sadd.s32 %s130, 1
      %p134 = scmp.eq.s32.totalorder %s28, 1
      %p135 = scmp.ne.s32.totalorder %s130, %s132
      %p136 = scmp.eq.s32.totalorder %s28, 0
      %p137 = por %p135, %p136
      %p138 = scmp.ne.s32.totalorder %s130, %s132
      %p139 = scmp.eq.s32.totalorder %s33, 1
      %p140 = por %p138, %p139
      %p141 = scmp.ne.s32.totalorder %s132, %s133
      %p142 = scmp.eq.s32.totalorder %s33, 0
      %p143 = por %p141, %p142
      %p144 = scmp.ne.s32.totalorder %s132, %s133
      %p145 = scmp.eq.s32.totalorder %s34, 1
      %p146 = por %p144, %p145
      %p148 = scmp.ne.s32.totalorder %s133, %s147
      %p149 = scmp.eq.s32.totalorder %s34, 0
      %p150 = por %p148, %p149
      %s152 = sadd.s32 %s151, 1
      %p155 = scmp.eq.s32.totalorder %s28, 1
      %p156 = scmp.ne.s32.totalorder %s151, %s153
      %p157 = scmp.eq.s32.totalorder %s28, 0
      %p158 = por %p156, %p157
      %p159 = scmp.ne.s32.totalorder %s151, %s153
      %p160 = scmp.eq.s32.totalorder %s33, 1
      %p161 = por %p159, %p160
      %p162 = scmp.ne.s32.totalorder %s153, %s154
      %p163 = scmp.eq.s32.totalorder %s33, 0
      %p164 = por %p162, %p163
      %p165 = scmp.ne.s32.totalorder %s153, %s154
      %p166 = scmp.eq.s32.totalorder %s34, 1
      %p167 = por %p165, %p166
      %p169 = scmp.ne.s32.totalorder %s154, %s168
      %p170 = scmp.eq.s32.totalorder %s34, 0
      %p171 = por %p169, %p170
      %s173 = sadd.s32 %s172, 1
      %p176 = scmp.eq.s32.totalorder %s28, 1
      %p177 = scmp.ne.s32.totalorder %s172, %s174
      %p178 = scmp.eq.s32.totalorder %s28, 0
      %p179 = por %p177, %p178
      %p180 = scmp.ne.s32.totalorder %s172, %s174
      %p181 = scmp.eq.s32.totalorder %s33, 1
      %p182 = por %p180, %p181
      %p183 = scmp.ne.s32.totalorder %s174, %s175
      %p184 = scmp.eq.s32.totalorder %s33, 0
      %p185 = por %p183, %p184
      %p186 = scmp.ne.s32.totalorder %s174, %s175
      %p187 = scmp.eq.s32.totalorder %s34, 1
      %p188 = por %p186, %p187
      %p190 = scmp.ne.s32.totalorder %s175, %s189
      %p191 = scmp.eq.s32.totalorder %s34, 0
      %p192 = por %p190, %p191
      %s194 = sadd.s32 %s193, 1
      %p197 = scmp.eq.s32.totalorder %s28, 1
      %p198 = scmp.ne.s32.totalorder %s193, %s195
      %p199 = scmp.eq.s32.totalorder %s28, 0
      %p200 = por %p198, %p199
      %p201 = scmp.ne.s32.totalorder %s193, %s195
      %p202 = scmp.eq.s32.totalorder %s33, 1
      %p203 = por %p201, %p202
      %p204 = scmp.ne.s32.totalorder %s195, %s196
      %p205 = scmp.eq.s32.totalorder %s33, 0
      %p206 = por %p204, %p205
      %p207 = scmp.ne.s32.totalorder %s195, %s196
      %p208 = scmp.eq.s32.totalorder %s34, 1
      %p209 = por %p207, %p208
      %p211 = scmp.ne.s32.totalorder %s196, %s210
      %p212 = scmp.eq.s32.totalorder %s34, 0
      %p213 = por %p211, %p212
      %s215 = sadd.s32 %s214, 1
      %p218 = scmp.eq.s32.totalorder %s28, 1
      %p219 = scmp.ne.s32.totalorder %s214, %s216
      %p220 = scmp.eq.s32.totalorder %s28, 0
      %p221 = por %p219, %p220
      %p222 = scmp.ne.s32.totalorder %s214, %s216
      %p223 = scmp.eq.s32.totalorder %s33, 1
      %p224 = por %p222, %p223
      %p225 = scmp.ne.s32.totalorder %s216, %s217
      %p226 = scmp.eq.s32.totalorder %s33, 0
      %p227 = por %p225, %p226
      %p228 = scmp.ne.s32.totalorder %s216, %s217
      %p229 = scmp.eq.s32.totalorder %s34, 1
      %p230 = por %p228, %p229
      %p232 = scmp.ne.s32.totalorder %s217, %s231
      %p233 = scmp.eq.s32.totalorder %s34, 0
      %p234 = por %p232, %p233
      %s236 = sadd.s32 %s235, 1
      %p239 = scmp.eq.s32.totalorder %s28, 1
      %p240 = scmp.ne.s32.totalorder %s235, %s237
      %p241 = scmp.eq.s32.totalorder %s28, 0
      %p242 = por %p240, %p241
      %p243 = scmp.ne.s32.totalorder %s235, %s237
      %p244 = scmp.eq.s32.totalorder %s33, 1
      %p245 = por %p243, %p244
      %p246 = scmp.ne.s32.totalorder %s237, %s238
      %p247 = scmp.eq.s32.totalorder %s33, 0
      %p248 = por %p246, %p247
      %p249 = scmp.ne.s32.totalorder %s237, %s238
      %p250 = scmp.eq.s32.totalorder %s34, 1
      %p251 = por %p249, %p250
      %p253 = scmp.ne.s32.totalorder %s238, %s252
      %p254 = scmp.eq.s32.totalorder %s34, 0
      %p255 = por %p253, %p254
      %s256 = ssub.s32 %s28, %s35
      %p257 = scmp.eq.s32.totalorder %s256, 0
      %s259 = sadd.s32 %s258, 1
      %s260 = scalar_select %p257, %s258, %s259
      %p263 = pneg %p257
      %p264 = scmp.eq.s32.totalorder %s28, 1
      %p265 = por %p263, %p264
      %p266 = scmp.ne.s32.totalorder %s258, %s261
      %p267 = scmp.eq.s32.totalorder %s28, 0
      %p268 = por %p266, %p267
      %p269 = scmp.ne.s32.totalorder %s258, %s261
      %p270 = scmp.eq.s32.totalorder %s33, 1
      %p271 = por %p269, %p270
      %p272 = scmp.ne.s32.totalorder %s261, %s262
      %p273 = scmp.eq.s32.totalorder %s33, 0
      %p274 = por %p272, %p273
      %p275 = scmp.ne.s32.totalorder %s261, %s262
      %p276 = scmp.eq.s32.totalorder %s34, 1
      %p277 = por %p275, %p276
      %p279 = scmp.ne.s32.totalorder %s262, %s278
      %p280 = scmp.eq.s32.totalorder %s34, 0
      %p281 = por %p279, %p280
      %s282 = ssub.s32 %s28, %s35
      %p283 = scmp.eq.s32.totalorder %s282, 0
      %s285 = sadd.s32 %s284, 1
      %s286 = scalar_select %p283, %s284, %s285
      %p289 = pneg %p283
      %p290 = scmp.eq.s32.totalorder %s28, 1
      %p291 = por %p289, %p290
      %p292 = scmp.ne.s32.totalorder %s284, %s287
      %p293 = scmp.eq.s32.totalorder %s28, 0
      %p294 = por %p292, %p293
      %p295 = scmp.ne.s32.totalorder %s284, %s287
      %p296 = scmp.eq.s32.totalorder %s33, 1
      %p297 = por %p295, %p296
      %p298 = scmp.ne.s32.totalorder %s287, %s288
      %p299 = scmp.eq.s32.totalorder %s33, 0
      %p300 = por %p298, %p299
      %p301 = scmp.ne.s32.totalorder %s287, %s288
      %p302 = scmp.eq.s32.totalorder %s34, 1
      %p303 = por %p301, %p302
      %p305 = scmp.ne.s32.totalorder %s288, %s304
      %p306 = scmp.eq.s32.totalorder %s34, 0
      %p307 = por %p305, %p306
      %p308 = scmp.le.s32.totalorder 1, %s28
      %p309 = scmp.lt.s32.totalorder %s28, 3
      %p310 = pnand %p308, %p309
      %p311 = pneg %p310
      // Predicated region
      $region9: #{tpu_custom_call.1} parent=5 // pred_check
        _
      $region10: #{tpu_custom_call.1} parent=5 // pred_check_branch
        %313 = sbr.rel (%p310) target = $region12
      $region11: #{tpu_custom_call.1} parent=5 // pred_region
        %s314 = ssub.s32 %s28, 1
        // Predicated region
        $region13: #{tpu_custom_call.1} parent=11 // pred_check
          %p315 = pneg %p101
        $region14: #{tpu_custom_call.1} parent=11 // pred_check_branch
          %317 = sbr.rel (%p315) target = $region16
        $region15: #{tpu_custom_call.1} parent=11 // pred_region
          _
        $region16: #{tpu_custom_call.1} parent=11 // pred_fallthru
          _
        // Predicated region
        $region17: #{tpu_custom_call.1} parent=11 // pred_check
          %p318 = pneg %p122
        $region18: #{tpu_custom_call.1} parent=11 // pred_check_branch
          %320 = sbr.rel (%p318) target = $region20
        $region19: #{tpu_custom_call.1} parent=11 // pred_region
          _
        $region20: #{tpu_custom_call.1} parent=11 // pred_fallthru
          _
        // Predicated region
        $region21: #{tpu_custom_call.1} parent=11 // pred_check
          %p321 = pneg %p143
        $region22: #{tpu_custom_call.1} parent=11 // pred_check_branch
          %323 = sbr.rel (%p321) target = $region24
        $region23: #{tpu_custom_call.1} parent=11 // pred_region
          _
        $region24: #{tpu_custom_call.1} parent=11 // pred_fallthru
          _
        // Predicated region
        $region25: #{tpu_custom_call.1} parent=11 // pred_check
          %p324 = pneg %p164
        $region26: #{tpu_custom_call.1} parent=11 // pred_check_branch
          %326 = sbr.rel (%p324) target = $region28
        $region27: #{tpu_custom_call.1} parent=11 // pred_region
          _
        $region28: #{tpu_custom_call.1} parent=11 // pred_fallthru
          _
        // Predicated region
        $region29: #{tpu_custom_call.1} parent=11 // pred_check
          %p327 = pneg %p185
        $region30: #{tpu_custom_call.1} parent=11 // pred_check_branch
          %329 = sbr.rel (%p327) target = $region32
        $region31: #{tpu_custom_call.1} parent=11 // pred_region
          _
        $region32: #{tpu_custom_call.1} parent=11 // pred_fallthru
          _
        // Predicated region
        $region33: #{tpu_custom_call.1} parent=11 // pred_check
          %p330 = pneg %p206
        $region34: #{tpu_custom_call.1} parent=11 // pred_check_branch
          %332 = sbr.rel (%p330) target = $region36
        $region35: #{tpu_custom_call.1} parent=11 // pred_region
          %s334 = ssub.s32 1024, 1024
          %335 = vsyncadd [#allocation6], %s334
          %s336 = sshll.u32 [#allocation5], 4
          %s337 = int_to_ptr.vmem [resolvable:$true] %s336
          %342 = dma.hbm_to_vmem [thread:$0]  %s7, 1024, %s337, [#allocation6], 128, 128, 8
        $region36: #{tpu_custom_call.1} parent=11 // pred_fallthru
          _
        // Predicated region
        $region37: #{tpu_custom_call.1} parent=11 // pred_check
          %p343 = pneg %p227
        $region38: #{tpu_custom_call.1} parent=11 // pred_check_branch
          %345 = sbr.rel (%p343) target = $region40
        $region39: #{tpu_custom_call.1} parent=11 // pred_region
          %s347 = ssub.s32 512, 512
          %348 = vsyncadd [#allocation6], %s347
          %s349 = sshll.u32 [#allocation7], 4
          %s350 = int_to_ptr.vmem [resolvable:$true] %s349
          %355 = dma.hbm_to_vmem [thread:$0]  %s8, 512, %s350, [#allocation6], 128, 128, 8
        $region40: #{tpu_custom_call.1} parent=11 // pred_fallthru
          _
        // Predicated region
        $region41: #{tpu_custom_call.1} parent=11 // pred_check
          %p356 = pneg %p248
        $region42: #{tpu_custom_call.1} parent=11 // pred_check_branch
          %358 = sbr.rel (%p356) target = $region44
        $region43: #{tpu_custom_call.1} parent=11 // pred_region
          _
        $region44: #{tpu_custom_call.1} parent=11 // pred_fallthru
          _
      $region12: #{tpu_custom_call.1} parent=5 // pred_fallthru
        _
      %p359 = scmp.lt.s32.totalorder %s28, 2
      // Predicated region
      $region45: #{tpu_custom_call.1} parent=5 // pred_check
        %p360 = pneg %p359
      $region46: #{tpu_custom_call.1} parent=5 // pred_check_branch
        %362 = sbr.rel (%p360) target = $region48
      $region47: #{tpu_custom_call.1} parent=5 // pred_region
        // Predicated region
        $region49: #{tpu_custom_call.1} parent=47 // pred_check
          %p363 = pneg %p48
        $region50: #{tpu_custom_call.1} parent=47 // pred_check_branch
          %365 = sbr.rel (%p363) target = $region52
        $region51: #{tpu_custom_call.1} parent=47 // pred_region
          %s366 = sand.u32 %s38, 1
          %s367 = scalar_lea.sflag [#allocation3], %s366
          %s368 = sand.u32 %s38, 1
          %s369 = smul.addr %s368, 8
          %s370 = scalar_lea.vmem [#allocation2], %s369
          %s372 = ssub.s32 128, 128
          %373 = vsyncadd %s367, %s372
          %s374 = smul.addr %s28, 128
          %s375 = scalar_lea.hbm %s0, %s374
          %s377 = sshll.u32 %s370, 4
          %s378 = int_to_ptr.vmem [resolvable:$true] %s377
          %380 = dma.hbm_to_vmem [thread:$0]  %s375, 128, %s378, %s367
        $region52: #{tpu_custom_call.1} parent=47 // pred_fallthru
          _
        // Predicated region
        $region53: #{tpu_custom_call.1} parent=47 // pred_check
          %p381 = pneg %p74
        $region54: #{tpu_custom_call.1} parent=47 // pred_check_branch
          %383 = sbr.rel (%p381) target = $region56
        $region55: #{tpu_custom_call.1} parent=47 // pred_region
          %p384 = scmp.lt.s32.totalorder %s28, 1
          %s385 = scalar_select %p384, %s28, 1
          %s386 = scalar_lea.vmem %s1, %s385
        $region56: #{tpu_custom_call.1} parent=47 // pred_fallthru
          _
      $region48: #{tpu_custom_call.1} parent=5 // pred_fallthru
        _
      %p387 = scmp.le.s32.totalorder 1, %s28
      %p388 = scmp.lt.s32.totalorder %s28, 3
      %p389 = pnand %p387, %p388
      %p390 = pneg %p389
      // Predicated region
      $region57: #{tpu_custom_call.1} parent=5 // pred_check
        _
      $region58: #{tpu_custom_call.1} parent=5 // pred_check_branch
        %392 = sbr.rel (%p389) target = $region60
      $region59: #{tpu_custom_call.1} parent=5 // pred_region
        %s393 = ssub.s32 %s28, 1
        %s394 = sand.u32 %s41, 1
        %s395 = scalar_lea.sflag [#allocation3], %s394
        %s396 = sand.u32 %s41, 1
        %s397 = smul.addr %s396, 8
        %s398 = scalar_lea.vmem [#allocation2], %s397
        // Predicated region
        $region61: #{tpu_custom_call.1} parent=59 // pred_check
          %p399 = pneg %p54
        $region62: #{tpu_custom_call.1} parent=59 // pred_check_branch
          %401 = sbr.rel (%p399) target = $region64
        $region63: #{tpu_custom_call.1} parent=59 // pred_region
          %402 = dma.done %s395, 128
        $region64: #{tpu_custom_call.1} parent=59 // pred_fallthru
          _
        // Predicated region
        $region65: #{tpu_custom_call.1} parent=59 // pred_check
          %p403 = pneg %p206
        $region66: #{tpu_custom_call.1} parent=59 // pred_check_branch
          %405 = sbr.rel (%p403) target = $region68
        $region67: #{tpu_custom_call.1} parent=59 // pred_region
          %406 = dma.done [#allocation6], 1024
        $region68: #{tpu_custom_call.1} parent=59 // pred_fallthru
          _
        // Predicated region
        $region69: #{tpu_custom_call.1} parent=59 // pred_check
          %p407 = pneg %p227
        $region70: #{tpu_custom_call.1} parent=59 // pred_check_branch
          %409 = sbr.rel (%p407) target = $region72
        $region71: #{tpu_custom_call.1} parent=59 // pred_region
          %410 = dma.done [#allocation6], 512
        $region72: #{tpu_custom_call.1} parent=59 // pred_fallthru
          _
        %s411 = sand.u32 %s41, 1
        %s412 = scalar_lea.sflag [#allocation3], %s411
        %s413 = sand.u32 %s41, 1
        %s414 = smul.addr %s413, 8
        %s415 = scalar_lea.vmem [#allocation2], %s414
        %p416 = pneg %p54
        %p417 = pneg %p51
        %p418 = scmp.lt.s32.totalorder %s33, 1
        %s419 = scalar_select %p418, %s33, 1
        %s420 = scalar_lea.vmem %s1, %s419
        %p421 = pneg %p80
        %p422 = pneg %p77
        %p423 = pneg %p101
        %p424 = pneg %p98
        %p425 = pneg %p122
        %p426 = pneg %p119
        %p427 = pneg %p143
        %p428 = pneg %p140
        %p429 = pneg %p164
        %p430 = pneg %p161
        %p431 = pneg %p185
        %p432 = pneg %p182
        %p433 = pneg %p206
        %p434 = pneg %p203
        %p435 = pneg %p227
        %p436 = pneg %p224
        %p437 = pneg %p248
        %p438 = pneg %p245
        %p439 = pneg %p274
        %p440 = pneg %p271
        %s441 = sand.u32 %s261, 1
        %s442 = scalar_lea.sflag [#allocation4], %s441
        %s443 = sand.u32 %s261, 1
        %s444 = smul.addr %s443, 8
        %s445 = scalar_lea.vmem [#allocation8], %s444
        %p446 = pneg %p300
        %p447 = pneg %p297
        %s448 = sand.u32 %s287, 1
        %s449 = scalar_lea.sflag [#allocation10], %s448
        %s450 = sand.u32 %s287, 1
        %s451 = scalar_lea.vmem [#allocation9], %s450
        %p452 = scmp.lt.s32.totalorder %s33, 1
        %s453 = scalar_select %p452, %s33, 1
        %s454 = scalar_lea.vmem %s1, %s453
        %v455 = vld [vmem:[%s398] sm:$0xff]
        %v456 = vld [vmem:[%s454] sm:$0x1]
        %v457 = vld [vmem:[%s2] sm:$0xff]
        %v458 = vld [vmem:[%s2 + $0x8] sm:$0xff]
        %v459 = vld [vmem:[%s2 + $0x10] sm:$0xff]
        %v460 = vld [vmem:[%s2 + $0x18] sm:$0xff]
        %v461 = vld [vmem:[%s9] sm:$0xff]
        %v462 = vld [vmem:[%s9 + $0x8] sm:$0xff]
        %v463 = vld [vmem:[%s9 + $0x10] sm:$0xff]
        %v464 = vld [vmem:[%s9 + $0x18] sm:$0xff]
        %v465 = vld [vmem:[%s9 + $0x20] sm:$0xff]
        %v466 = vld [vmem:[%s9 + $0x28] sm:$0xff]
        %v467 = vld [vmem:[%s9 + $0x30] sm:$0xff]
        %v468 = vld [vmem:[%s9 + $0x38] sm:$0xff]
        %v469 = vld [vmem:[%s9 + $0x40] sm:$0xff]
        %v470 = vld [vmem:[%s9 + $0x48] sm:$0xff]
        %v471 = vld [vmem:[%s9 + $0x50] sm:$0xff]
        %v472 = vld [vmem:[%s9 + $0x58] sm:$0xff]
        %v473 = vld [vmem:[%s9 + $0x60] sm:$0xff]
        %v474 = vld [vmem:[%s9 + $0x68] sm:$0xff]
        %v475 = vld [vmem:[%s9 + $0x70] sm:$0xff]
        %v476 = vld [vmem:[%s9 + $0x78] sm:$0xff]
        %v477 = vmul.f32 %v455, %v457
        %v478 = vadd.f32 %v477, %v458
        %v479 = vld [vmem:[%s6] sm:$0xff]
        %v480 = vld [vmem:[%s6 + $0x8] sm:$0xff]
        %v481 = vld [vmem:[%s6 + $0x10] sm:$0xff]
        %v482 = vld [vmem:[%s6 + $0x18] sm:$0xff]
        %v483 = vld [vmem:[#allocation5] sm:$0xff]
        %v484 = vld [vmem:[#allocation5 + $0x8] sm:$0xff]
        %v485 = vld [vmem:[#allocation5 + $0x10] sm:$0xff]
        %v486 = vld [vmem:[#allocation5 + $0x18] sm:$0xff]
        %v487 = vld [vmem:[#allocation7] sm:$0xff]
        %v488 = vld [vmem:[#allocation7 + $0x8] sm:$0xff]
        %vm489 = vcmask 64512
        %v491 = vsel %vm489, %v479, 0
        %v494 = vsel %vm489, %v480, 0
        %v497 = vsel %vm489, %v481, 0
        %v500 = vsel %vm489, %v482, 0
        %502 = vmatprep.subr.mxu0 0.0
        %503 = vmatpush1.msra.mxu0 0.0
        %504 = vmatprep.subr.mxu0 0.0
        %505 = vmatpush1.msra.mxu0 0.0
        %506 = vmatprep.subr.mxu0 0.0
        %507 = vmatpush1.msra.mxu0 0.0
        %508 = vmatprep.subr.mxu0 0.0
        %509 = vmatpush1.msra.mxu0 0.0
        %510 = vmatprep.subr.mxu0 0.0
        %511 = vmatpush1.msra.mxu0 0.0
        %512 = vmatprep.subr.mxu0 0.0
        %513 = vmatpush1.msra.mxu0 0.0
        %514 = vmatprep.subr.mxu0 0.0
        %515 = vmatpush1.msra.mxu0 0.0
        %516 = vmatprep.subr.mxu0 0.0
        %517 = vmatpush1.msra.mxu0 0.0
        %518 = vmatprep.subr.mxu0 0.0
        %519 = vmatpush1.msra.mxu0 0.0
        %520 = vmatprep.subr.mxu0 0.0
        %521 = vmatpush1.msra.mxu0 0.0
        %522 = vmatprep.subr.mxu0 0.0
        %523 = vmatpush1.msra.mxu0 0.0
        %524 = vmatprep.subr.mxu0 0.0
        %525 = vmatpush1.msra.mxu0 0.0
        %526 = vmatprep.subr.mxu0 0.0
        %527 = vmatpush1.msra.mxu0 0.0
        %528 = vmatprep.subr.mxu0 0.0
        %529 = vmatpush1.msra.mxu0 0.0
        %530 = vmatprep.subr.mxu0 0.0
        %531 = vmatpush1.msra.mxu0 0.0
        %532 = vmatprep.subr.mxu0 0.0
        %533 = vmatpush1.msra.mxu0 %v478
        %534 = vmatprep.subr.mxu0 0.0
        %535 = vmatpush2.msra.mxu0 0.0
        %536 = vmatprep.subr.mxu0 0.0
        %537 = vmatpush2.msra.mxu0 0.0
        %538 = vmatprep.subr.mxu0 0.0
        %539 = vmatpush2.msra.mxu0 0.0
        %540 = vmatprep.subr.mxu0 0.0
        %541 = vmatpush2.msra.mxu0 0.0
        %542 = vmatprep.subr.mxu0 0.0
        %543 = vmatpush2.msra.mxu0 0.0
        %544 = vmatprep.subr.mxu0 0.0
        %545 = vmatpush2.msra.mxu0 0.0
        %546 = vmatprep.subr.mxu0 0.0
        %547 = vmatpush2.msra.mxu0 0.0
        %548 = vmatprep.subr.mxu0 0.0
        %549 = vmatpush2.msra.mxu0 0.0
        %550 = vmatprep.subr.mxu0 0.0
        %551 = vmatpush2.msra.mxu0 0.0
        %552 = vmatprep.subr.mxu0 0.0
        %553 = vmatpush2.msra.mxu0 0.0
        %554 = vmatprep.subr.mxu0 0.0
        %555 = vmatpush2.msra.mxu0 0.0
        %556 = vmatprep.subr.mxu0 0.0
        %557 = vmatpush2.msra.mxu0 0.0
        %558 = vmatprep.subr.mxu0 0.0
        %559 = vmatpush2.msra.mxu0 0.0
        %560 = vmatprep.subr.mxu0 0.0
        %561 = vmatpush2.msra.mxu0 0.0
        %562 = vmatprep.subr.mxu0 0.0
        %563 = vmatpush2.msra.mxu0 0.0
        %564 = vmatprep.subr.mxu0 0.0
        %565 = vmatpush2.msra.mxu0 0.0
        %566 = vmatprep.mubr.f32.mxu0 0.0
        %567 = vmatmul.mubr.f32.gmra.mxu0 %v491
        %v568 = vpop.f32.mrf.mxu0
        %v569 = vadd.f32 %v461, %v568
        %v570 = vpop.f32.mrf.mxu0
        %571 = vmatprep.mubr.f32.mxu0 0.0
        %572 = vmatmul.mubr.f32.gmra.mxu0 %v494
        %v573 = vpop.f32.mrf.mxu0
        %v574 = vadd.f32 %v462, %v573
        %v575 = vpop.f32.mrf.mxu0
        %576 = vmatprep.mubr.f32.mxu0 0.0
        %577 = vmatmul.mubr.f32.gmra.mxu0 %v497
        %v578 = vpop.f32.mrf.mxu0
        %v579 = vadd.f32 %v463, %v578
        %v580 = vpop.f32.mrf.mxu0
        %581 = vmatprep.mubr.f32.mxu0 0.0
        %582 = vmatmul.mubr.f32.gmra.mxu0 %v500
        %v583 = vpop.f32.mrf.mxu0
        %v584 = vadd.f32 %v464, %v583
        %v585 = vpop.f32.mrf.mxu0
        %586 = vdwg.mxu0
        %v587 = vmul.f32 %v569, 0.5
        %v588 = vmul.f32 %v574, 0.5
        %v589 = vmul.f32 %v579, 0.5
        %v590 = vmul.f32 %v584, 0.5
        %v591 = vmul.f32 %v569, 0.044715
        %v592 = vmul.f32 %v574, 0.044715
        %v593 = vmul.f32 %v579, 0.044715
        %v594 = vmul.f32 %v584, 0.044715
        %v595 = vmul.f32 %v591, %v569
        %v596 = vmul.f32 %v592, %v574
        %v597 = vmul.f32 %v593, %v579
        %v598 = vmul.f32 %v594, %v584
        %v599 = vmul.f32 %v595, %v569
        %v600 = vmul.f32 %v596, %v574
        %v601 = vmul.f32 %v597, %v579
        %v602 = vmul.f32 %v598, %v584
        %v603 = vadd.f32 %v569, %v599
        %v604 = vadd.f32 %v574, %v600
        %v605 = vadd.f32 %v579, %v601
        %v606 = vadd.f32 %v584, %v602
        %v607 = vmul.f32 %v603, 0.7978846
        %v608 = vmul.f32 %v604, 0.7978846
        %v609 = vmul.f32 %v605, 0.7978846
        %v610 = vmul.f32 %v606, 0.7978846
        %v611 = vtanh.pop %v607
        %v612 = vtanh.pop %v608
        %v613 = vtanh.pop %v609
        %v614 = vtanh.pop %v610
        %v615 = vadd.f32 %v611, 1.0
        %v616 = vadd.f32 %v612, 1.0
        %v617 = vadd.f32 %v613, 1.0
        %v618 = vadd.f32 %v614, 1.0
        %v619 = vmul.f32 %v587, %v615
        %v620 = vmul.f32 %v588, %v616
        %v621 = vmul.f32 %v589, %v617
        %v622 = vmul.f32 %v590, %v618
        %vm623 = vcmask 261120
        %v625 = vsel %vm623, %v483, 0
        %v628 = vsel %vm623, %v484, 0
        %v631 = vsel %vm623, %v485, 0
        %v634 = vsel %vm623, %v486, 0
        %636 = vmatprep.subr.mxu0 0.0
        %637 = vmatpush1.msra.mxu0 0.0
        %638 = vmatprep.subr.mxu0 0.0
        %639 = vmatpush1.msra.mxu0 0.0
        %640 = vmatprep.subr.mxu0 0.0
        %641 = vmatpush1.msra.mxu0 0.0
        %642 = vmatprep.subr.mxu0 0.0
        %643 = vmatpush1.msra.mxu0 0.0
        %644 = vmatprep.subr.mxu0 0.0
        %645 = vmatpush1.msra.mxu0 0.0
        %646 = vmatprep.subr.mxu0 0.0
        %647 = vmatpush1.msra.mxu0 0.0
        %648 = vmatprep.subr.mxu0 0.0
        %649 = vmatpush1.msra.mxu0 0.0
        %650 = vmatprep.subr.mxu0 0.0
        %651 = vmatpush1.msra.mxu0 0.0
        %652 = vmatprep.subr.mxu0 0.0
        %653 = vmatpush1.msra.mxu0 0.0
        %654 = vmatprep.subr.mxu0 0.0
        %655 = vmatpush1.msra.mxu0 0.0
        %656 = vmatprep.subr.mxu0 0.0
        %657 = vmatpush1.msra.mxu0 0.0
        %658 = vmatprep.subr.mxu0 0.0
        %659 = vmatpush1.msra.mxu0 0.0
        %660 = vmatprep.subr.mxu0 0.0
        %661 = vmatpush1.msra.mxu0 %v622
        %662 = vmatprep.subr.mxu0 0.0
        %663 = vmatpush1.msra.mxu0 %v621
        %664 = vmatprep.subr.mxu0 0.0
        %665 = vmatpush1.msra.mxu0 %v620
        %666 = vmatprep.subr.mxu0 0.0
        %667 = vmatpush1.msra.mxu0 %v619
        %668 = vmatprep.subr.mxu0 0.0
        %669 = vmatpush2.msra.mxu0 0.0
        %670 = vmatprep.subr.mxu0 0.0
        %671 = vmatpush2.msra.mxu0 0.0
        %672 = vmatprep.subr.mxu0 0.0
        %673 = vmatpush2.msra.mxu0 0.0
        %674 = vmatprep.subr.mxu0 0.0
        %675 = vmatpush2.msra.mxu0 0.0
        %676 = vmatprep.subr.mxu0 0.0
        %677 = vmatpush2.msra.mxu0 0.0
        %678 = vmatprep.subr.mxu0 0.0
        %679 = vmatpush2.msra.mxu0 0.0
        %680 = vmatprep.subr.mxu0 0.0
        %681 = vmatpush2.msra.mxu0 0.0
        %682 = vmatprep.subr.mxu0 0.0
        %683 = vmatpush2.msra.mxu0 0.0
        %684 = vmatprep.subr.mxu0 0.0
        %685 = vmatpush2.msra.mxu0 0.0
        %686 = vmatprep.subr.mxu0 0.0
        %687 = vmatpush2.msra.mxu0 0.0
        %688 = vmatprep.subr.mxu0 0.0
        %689 = vmatpush2.msra.mxu0 0.0
        %690 = vmatprep.subr.mxu0 0.0
        %691 = vmatpush2.msra.mxu0 0.0
        %692 = vmatprep.subr.mxu0 0.0
        %693 = vmatpush2.msra.mxu0 0.0
        %694 = vmatprep.subr.mxu0 0.0
        %695 = vmatpush2.msra.mxu0 0.0
        %696 = vmatprep.subr.mxu0 0.0
        %697 = vmatpush2.msra.mxu0 0.0
        %698 = vmatprep.subr.mxu0 0.0
        %699 = vmatpush2.msra.mxu0 0.0
        %700 = vmatprep.mubr.f32.mxu0 0.0
        %701 = vmatmul.mubr.f32.gmra.mxu0 %v625
        %v702 = vpop.f32.mrf.mxu0
        %v703 = vadd.f32 %v465, %v702
        %v704 = vpop.f32.mrf.mxu0
        %705 = vmatprep.mubr.f32.mxu0 0.0
        %706 = vmatmul.mubr.f32.gmra.mxu0 %v628
        %v707 = vpop.f32.mrf.mxu0
        %v708 = vadd.f32 %v466, %v707
        %v709 = vpop.f32.mrf.mxu0
        %710 = vmatprep.mubr.f32.mxu0 0.0
        %711 = vmatmul.mubr.f32.gmra.mxu0 %v631
        %v712 = vpop.f32.mrf.mxu0
        %v713 = vadd.f32 %v467, %v712
        %v714 = vpop.f32.mrf.mxu0
        %715 = vmatprep.mubr.f32.mxu0 0.0
        %716 = vmatmul.mubr.f32.gmra.mxu0 %v634
        %v717 = vpop.f32.mrf.mxu0
        %v718 = vadd.f32 %v468, %v717
        %v719 = vpop.f32.mrf.mxu0
        %720 = vdwg.mxu0
        %v721 = vmul.f32 %v703, 0.5
        %v722 = vmul.f32 %v708, 0.5
        %v723 = vmul.f32 %v713, 0.5
        %v724 = vmul.f32 %v718, 0.5
        %v725 = vmul.f32 %v703, 0.044715
        %v726 = vmul.f32 %v708, 0.044715
        %v727 = vmul.f32 %v713, 0.044715
        %v728 = vmul.f32 %v718, 0.044715
        %v729 = vmul.f32 %v725, %v703
        %v730 = vmul.f32 %v726, %v708
        %v731 = vmul.f32 %v727, %v713
        %v732 = vmul.f32 %v728, %v718
        %v733 = vmul.f32 %v729, %v703
        %v734 = vmul.f32 %v730, %v708
        %v735 = vmul.f32 %v731, %v713
        %v736 = vmul.f32 %v732, %v718
        %v737 = vadd.f32 %v703, %v733
        %v738 = vadd.f32 %v708, %v734
        %v739 = vadd.f32 %v713, %v735
        %v740 = vadd.f32 %v718, %v736
        %v741 = vmul.f32 %v737, 0.7978846
        %v742 = vmul.f32 %v738, 0.7978846
        %v743 = vmul.f32 %v739, 0.7978846
        %v744 = vmul.f32 %v740, 0.7978846
        %v745 = vtanh.pop %v741
        %v746 = vtanh.pop %v742
        %v747 = vtanh.pop %v743
        %v748 = vtanh.pop %v744
        %v749 = vadd.f32 %v745, 1.0
        %v750 = vadd.f32 %v746, 1.0
        %v751 = vadd.f32 %v747, 1.0
        %v752 = vadd.f32 %v748, 1.0
        %v753 = vmul.f32 %v721, %v749
        %v754 = vmul.f32 %v722, %v750
        %v755 = vmul.f32 %v723, %v751
        %v756 = vmul.f32 %v724, %v752
        %v758 = vsel %vm623, %v487, 0
        %v761 = vsel %vm623, %v488, 0
        %763 = vmatprep.subr.mxu0 0.0
        %764 = vmatpush1.msra.mxu0 0.0
        %765 = vmatprep.subr.mxu0 0.0
        %766 = vmatpush1.msra.mxu0 0.0
        %767 = vmatprep.subr.mxu0 0.0
        %768 = vmatpush1.msra.mxu0 0.0
        %769 = vmatprep.subr.mxu0 0.0
        %770 = vmatpush1.msra.mxu0 0.0
        %771 = vmatprep.subr.mxu0 0.0
        %772 = vmatpush1.msra.mxu0 0.0
        %773 = vmatprep.subr.mxu0 0.0
        %774 = vmatpush1.msra.mxu0 0.0
        %775 = vmatprep.subr.mxu0 0.0
        %776 = vmatpush1.msra.mxu0 0.0
        %777 = vmatprep.subr.mxu0 0.0
        %778 = vmatpush1.msra.mxu0 0.0
        %779 = vmatprep.subr.mxu0 0.0
        %780 = vmatpush1.msra.mxu0 0.0
        %781 = vmatprep.subr.mxu0 0.0
        %782 = vmatpush1.msra.mxu0 0.0
        %783 = vmatprep.subr.mxu0 0.0
        %784 = vmatpush1.msra.mxu0 0.0
        %785 = vmatprep.subr.mxu0 0.0
        %786 = vmatpush1.msra.mxu0 0.0
        %787 = vmatprep.subr.mxu0 0.0
        %788 = vmatpush1.msra.mxu0 %v756
        %789 = vmatprep.subr.mxu0 0.0
        %790 = vmatpush1.msra.mxu0 %v755
        %791 = vmatprep.subr.mxu0 0.0
        %792 = vmatpush1.msra.mxu0 %v754
        %793 = vmatprep.subr.mxu0 0.0
        %794 = vmatpush1.msra.mxu0 %v753
        %795 = vmatprep.subr.mxu0 0.0
        %796 = vmatpush2.msra.mxu0 0.0
        %797 = vmatprep.subr.mxu0 0.0
        %798 = vmatpush2.msra.mxu0 0.0
        %799 = vmatprep.subr.mxu0 0.0
        %800 = vmatpush2.msra.mxu0 0.0
        %801 = vmatprep.subr.mxu0 0.0
        %802 = vmatpush2.msra.mxu0 0.0
        %803 = vmatprep.subr.mxu0 0.0
        %804 = vmatpush2.msra.mxu0 0.0
        %805 = vmatprep.subr.mxu0 0.0
        %806 = vmatpush2.msra.mxu0 0.0
        %807 = vmatprep.subr.mxu0 0.0
        %808 = vmatpush2.msra.mxu0 0.0
        %809 = vmatprep.subr.mxu0 0.0
        %810 = vmatpush2.msra.mxu0 0.0
        %811 = vmatprep.subr.mxu0 0.0
        %812 = vmatpush2.msra.mxu0 0.0
        %813 = vmatprep.subr.mxu0 0.0
        %814 = vmatpush2.msra.mxu0 0.0
        %815 = vmatprep.subr.mxu0 0.0
        %816 = vmatpush2.msra.mxu0 0.0
        %817 = vmatprep.subr.mxu0 0.0
        %818 = vmatpush2.msra.mxu0 0.0
        %819 = vmatprep.subr.mxu0 0.0
        %820 = vmatpush2.msra.mxu0 0.0
        %821 = vmatprep.subr.mxu0 0.0
        %822 = vmatpush2.msra.mxu0 0.0
        %823 = vmatprep.subr.mxu0 0.0
        %824 = vmatpush2.msra.mxu0 0.0
        %825 = vmatprep.subr.mxu0 0.0
        %826 = vmatpush2.msra.mxu0 0.0
        %827 = vmatprep.mubr.f32.mxu0 0.0
        %828 = vmatmul.mubr.f32.gmra.mxu0 %v758
        %v829 = vpop.f32.mrf.mxu0
        %v830 = vadd.f32 %v469, %v829
        %v831 = vpop.f32.mrf.mxu0
        %832 = vmatprep.mubr.f32.mxu0 0.0
        %833 = vmatmul.mubr.f32.gmra.mxu0 %v761
        %v834 = vpop.f32.mrf.mxu0
        %v835 = vadd.f32 %v470, %v834
        %v836 = vpop.f32.mrf.mxu0
        %837 = vdwg.mxu0
        %v838 = vtanh.pop %v830
        %v839 = vmul.f32 %v838, 1.442695
        %v840 = vpow.pop %v839
        %v841 = vmul.f32 %v478, %v840
        %v842 = vadd.f32 %v841, %v835
        %v843 = vrot.slane %v838, 4
        %v844 = vadd.f32 %v838, %v843
        %v845 = vrot.slane %v844, 2
        %v846 = vadd.f32 %v844, %v845
        %v847 = vrot.slane %v846, 1
        %v848 = vadd.f32 %v846, %v847
        %v849 = vsub.f32 %v456, %v848
        %v850 = vmul.f32 %v842, %v459
        %v851 = vadd.f32 %v850, %v460
        %v852 = vld [vmem:[%s3] sm:$0xf]
        %v853 = vld [vmem:[%s4] sm:$0xf]
        %v855 = vsel %vm489, %v852, 0
        %857 = vmatprep.subr.mxu0 0.0
        %858 = vmatpush1.msra.mxu0 0.0
        %859 = vmatprep.subr.mxu0 0.0
        %860 = vmatpush1.msra.mxu0 0.0
        %861 = vmatprep.subr.mxu0 0.0
        %862 = vmatpush1.msra.mxu0 0.0
        %863 = vmatprep.subr.mxu0 0.0
        %864 = vmatpush1.msra.mxu0 0.0
        %865 = vmatprep.subr.mxu0 0.0
        %866 = vmatpush1.msra.mxu0 0.0
        %867 = vmatprep.subr.mxu0 0.0
        %868 = vmatpush1.msra.mxu0 0.0
        %869 = vmatprep.subr.mxu0 0.0
        %870 = vmatpush1.msra.mxu0 0.0
        %871 = vmatprep.subr.mxu0 0.0
        %872 = vmatpush1.msra.mxu0 0.0
        %873 = vmatprep.subr.mxu0 0.0
        %874 = vmatpush1.msra.mxu0 0.0
        %875 = vmatprep.subr.mxu0 0.0
        %876 = vmatpush1.msra.mxu0 0.0
        %877 = vmatprep.subr.mxu0 0.0
        %878 = vmatpush1.msra.mxu0 0.0
        %879 = vmatprep.subr.mxu0 0.0
        %880 = vmatpush1.msra.mxu0 0.0
        %881 = vmatprep.subr.mxu0 0.0
        %882 = vmatpush1.msra.mxu0 0.0
        %883 = vmatprep.subr.mxu0 0.0
        %884 = vmatpush1.msra.mxu0 0.0
        %885 = vmatprep.subr.mxu0 0.0
        %886 = vmatpush1.msra.mxu0 0.0
        %887 = vmatprep.subr.mxu0 0.0
        %888 = vmatpush1.msra.mxu0 %v851
        %889 = vmatprep.subr.mxu0 0.0
        %890 = vmatpush2.msra.mxu0 0.0
        %891 = vmatprep.subr.mxu0 0.0
        %892 = vmatpush2.msra.mxu0 0.0
        %893 = vmatprep.subr.mxu0 0.0
        %894 = vmatpush2.msra.mxu0 0.0
        %895 = vmatprep.subr.mxu0 0.0
        %896 = vmatpush2.msra.mxu0 0.0
        %897 = vmatprep.subr.mxu0 0.0
        %898 = vmatpush2.msra.mxu0 0.0
        %899 = vmatprep.subr.mxu0 0.0
        %900 = vmatpush2.msra.mxu0 0.0
        %901 = vmatprep.subr.mxu0 0.0
        %902 = vmatpush2.msra.mxu0 0.0
        %903 = vmatprep.subr.mxu0 0.0
        %904 = vmatpush2.msra.mxu0 0.0
        %905 = vmatprep.subr.mxu0 0.0
        %906 = vmatpush2.msra.mxu0 0.0
        %907 = vmatprep.subr.mxu0 0.0
        %908 = vmatpush2.msra.mxu0 0.0
        %909 = vmatprep.subr.mxu0 0.0
        %910 = vmatpush2.msra.mxu0 0.0
        %911 = vmatprep.subr.mxu0 0.0
        %912 = vmatpush2.msra.mxu0 0.0
        %913 = vmatprep.subr.mxu0 0.0
        %914 = vmatpush2.msra.mxu0 0.0
        %915 = vmatprep.subr.mxu0 0.0
        %916 = vmatpush2.msra.mxu0 0.0
        %917 = vmatprep.subr.mxu0 0.0
        %918 = vmatpush2.msra.mxu0 0.0
        %919 = vmatprep.subr.mxu0 0.0
        %920 = vmatpush2.msra.mxu0 0.0
        %921 = vmatprep.mubr.f32.mxu0 0.0
        %922 = vmatmul.mubr.f32.gmra.mxu0 %v855
        %v923 = vpop.f32.mrf.mxu0
        %v924 = vadd.f32 %v853, %v923
        %v925 = vpop.f32.mrf.mxu0
        %926 = vdwg.mxu0
        %vm927 = vcmask 1043456
        %v928 = vsel %vm927, %v924, inf
        %v929 = vrot.slane %v928, 4
        %v930 = vmin.f32 %v928, %v929
        %v931 = vrot.slane %v930, 2
        %v932 = vmin.f32 %v930, %v931
        %v933 = vrot.slane %v932, 1
        %v934 = vmin.f32 %v932, %v933
        %v935 = vlaneseq
        %v936 = vshrl.u32 %v935, 7
        %vm937 = vcmp.le.f32.partialorder %v924, %v934
        %v938 = vsel %vm937, %v936, 4
        %v939 = vsel %vm927, %v938, 2147483647
        %v940 = vrot.slane %v939, 4
        %vm941 = vcmp.lt.s32.totalorder %v939, %v940
        %v942 = vsel %vm941, %v939, %v940
        %v943 = vrot.slane %v942, 2
        %vm944 = vcmp.lt.s32.totalorder %v942, %v943
        %v945 = vsel %vm944, %v942, %v943
        %v946 = vrot.slane %v945, 1
        %vm947 = vcmp.lt.s32.totalorder %v945, %v946
        %v948 = vsel %vm947, %v945, %v946
        %vm949 = vcmp.eq.s32.totalorder %v936, %v948
        %v950 = vsel %vm949, 1, 0
        %v951 = vcvt.s32.f32 %v950
        %v952 = vld [vmem:[%s5] sm:$0xff]
        %v953 = vld [vmem:[%s5 + $0x8] sm:$0xff]
        %v954 = vld [vmem:[%s5 + $0x10] sm:$0xff]
        %v955 = vld [vmem:[%s5 + $0x18] sm:$0xff]
        %v956 = vld [vmem:[%s5 + $0x20] sm:$0xff]
        %v957 = vld [vmem:[%s5 + $0x28] sm:$0xff]
        %v958 = vld [vmem:[%s5 + $0x30] sm:$0xff]
        %v959 = vld [vmem:[%s5 + $0x38] sm:$0xff]
        %v960 = vld [vmem:[%s5 + $0x40] sm:$0x1]
        %vm961 = vcmask 31744
        %v963 = vsel %vm961, %v952, 0
        %v966 = vsel %vm961, %v953, 0
        %v969 = vsel %vm961, %v954, 0
        %v972 = vsel %vm961, %v955, 0
        %v975 = vsel %vm961, %v956, 0
        %v978 = vsel %vm961, %v957, 0
        %v981 = vsel %vm961, %v958, 0
        %v984 = vsel %vm961, %v959, 0
        %v987 = vsel %vm961, %v960, 0
        %v990 = vsel %vm927, %v951, 0
        %992 = vmatprep.subr.mxu0 0.0
        %993 = vmatpush1.msra.mxu0 0.0
        %994 = vmatprep.subr.mxu0 0.0
        %995 = vmatpush1.msra.mxu0 0.0
        %996 = vmatprep.subr.mxu0 0.0
        %997 = vmatpush1.msra.mxu0 0.0
        %998 = vmatprep.subr.mxu0 0.0
        %999 = vmatpush1.msra.mxu0 0.0
        %1000 = vmatprep.subr.mxu0 0.0
        %1001 = vmatpush1.msra.mxu0 0.0
        %1002 = vmatprep.subr.mxu0 0.0
        %1003 = vmatpush1.msra.mxu0 0.0
        %1004 = vmatprep.subr.mxu0 0.0
        %1005 = vmatpush1.msra.mxu0 0.0
        %1006 = vmatprep.subr.mxu0 0.0
        %1007 = vmatpush1.msra.mxu0 0.0
        %1008 = vmatprep.subr.mxu0 0.0
        %1009 = vmatpush1.msra.mxu0 0.0
        %1010 = vmatprep.subr.mxu0 0.0
        %1011 = vmatpush1.msra.mxu0 0.0
        %1012 = vmatprep.subr.mxu0 0.0
        %1013 = vmatpush1.msra.mxu0 0.0
        %1014 = vmatprep.subr.mxu0 0.0
        %1015 = vmatpush1.msra.mxu0 0.0
        %1016 = vmatprep.subr.mxu0 0.0
        %1017 = vmatpush1.msra.mxu0 0.0
        %1018 = vmatprep.subr.mxu0 0.0
        %1019 = vmatpush1.msra.mxu0 0.0
        %1020 = vmatprep.subr.mxu0 0.0
        %1021 = vmatpush1.msra.mxu0 0.0
        %1022 = vmatprep.subr.mxu0 0.0
        %1023 = vmatpush1.msra.mxu0 %v990
        %1024 = vmatprep.subr.mxu0 0.0
        %1025 = vmatpush2.msra.mxu0 0.0
        %1026 = vmatprep.subr.mxu0 0.0
        %1027 = vmatpush2.msra.mxu0 0.0
        %1028 = vmatprep.subr.mxu0 0.0
        %1029 = vmatpush2.msra.mxu0 0.0
        %1030 = vmatprep.subr.mxu0 0.0
        %1031 = vmatpush2.msra.mxu0 0.0
        %1032 = vmatprep.subr.mxu0 0.0
        %1033 = vmatpush2.msra.mxu0 0.0
        %1034 = vmatprep.subr.mxu0 0.0
        %1035 = vmatpush2.msra.mxu0 0.0
        %1036 = vmatprep.subr.mxu0 0.0
        %1037 = vmatpush2.msra.mxu0 0.0
        %1038 = vmatprep.subr.mxu0 0.0
        %1039 = vmatpush2.msra.mxu0 0.0
        %1040 = vmatprep.subr.mxu0 0.0
        %1041 = vmatpush2.msra.mxu0 0.0
        %1042 = vmatprep.subr.mxu0 0.0
        %1043 = vmatpush2.msra.mxu0 0.0
        %1044 = vmatprep.subr.mxu0 0.0
        %1045 = vmatpush2.msra.mxu0 0.0
        %1046 = vmatprep.subr.mxu0 0.0
        %1047 = vmatpush2.msra.mxu0 0.0
        %1048 = vmatprep.subr.mxu0 0.0
        %1049 = vmatpush2.msra.mxu0 0.0
        %1050 = vmatprep.subr.mxu0 0.0
        %1051 = vmatpush2.msra.mxu0 0.0
        %1052 = vmatprep.subr.mxu0 0.0
        %1053 = vmatpush2.msra.mxu0 0.0
        %1054 = vmatprep.subr.mxu0 0.0
        %1055 = vmatpush2.msra.mxu0 0.0
        %1056 = vmatprep.mubr.f32.mxu0 0.0
        %1057 = vmatmul.mubr.f32.gmra.mxu0 %v963
        %v1058 = vpop.f32.mrf.mxu0
        %v1059 = vadd.f32 0.0, %v1058
        %v1060 = vpop.f32.mrf.mxu0
        %1061 = vmatprep.mubr.f32.mxu0 0.0
        %1062 = vmatmul.mubr.f32.gmra.mxu0 %v966
        %v1063 = vpop.f32.mrf.mxu0
        %v1064 = vadd.f32 0.0, %v1063
        %v1065 = vpop.f32.mrf.mxu0
        %1066 = vmatprep.mubr.f32.mxu0 0.0
        %1067 = vmatmul.mubr.f32.gmra.mxu0 %v969
        %v1068 = vpop.f32.mrf.mxu0
        %v1069 = vadd.f32 0.0, %v1068
        %v1070 = vpop.f32.mrf.mxu0
        %1071 = vmatprep.mubr.f32.mxu0 0.0
        %1072 = vmatmul.mubr.f32.gmra.mxu0 %v972
        %v1073 = vpop.f32.mrf.mxu0
        %v1074 = vadd.f32 0.0, %v1073
        %v1075 = vpop.f32.mrf.mxu0
        %1076 = vmatprep.mubr.f32.mxu0 0.0
        %1077 = vmatmul.mubr.f32.gmra.mxu0 %v975
        %v1078 = vpop.f32.mrf.mxu0
        %v1079 = vadd.f32 0.0, %v1078
        %v1080 = vpop.f32.mrf.mxu0
        %1081 = vmatprep.mubr.f32.mxu0 0.0
        %1082 = vmatmul.mubr.f32.gmra.mxu0 %v978
        %v1083 = vpop.f32.mrf.mxu0
        %v1084 = vadd.f32 0.0, %v1083
        %v1085 = vpop.f32.mrf.mxu0
        %1086 = vmatprep.mubr.f32.mxu0 0.0
        %1087 = vmatmul.mubr.f32.gmra.mxu0 %v981
        %v1088 = vpop.f32.mrf.mxu0
        %v1089 = vadd.f32 0.0, %v1088
        %v1090 = vpop.f32.mrf.mxu0
        %1091 = vmatprep.mubr.f32.mxu0 0.0
        %1092 = vmatmul.mubr.f32.gmra.mxu0 %v984
        %v1093 = vpop.f32.mrf.mxu0
        %v1094 = vadd.f32 0.0, %v1093
        %v1095 = vpop.f32.mrf.mxu0
        %1096 = vmatprep.mubr.f32.mxu0 0.0
        %1097 = vmatmul.mubr.f32.gmra.mxu0 %v987
        %v1098 = vpop.f32.mrf.mxu0
        %v1099 = vadd.f32 0.0, %v1098
        %v1100 = vpop.f32.mrf.mxu0
        %1101 = vdwg.mxu0
        %v1102 = vmul.f32 %v851, %v1079
        %v1103 = vadd.f32 %v1102, %v1084
        %s1104 = scalar_lea.vmem %s6, 32
        %v1105 = vld [vmem:[%s1104] sm:$0xff]
        %v1106 = vld [vmem:[%s1104 + $0x8] sm:$0xff]
        %v1107 = vld [vmem:[%s1104 + $0x10] sm:$0xff]
        %v1108 = vld [vmem:[%s1104 + $0x18] sm:$0xff]
        %s1109 = scalar_lea.vmem [#allocation5], 32
        %v1110 = vld [vmem:[%s1109] sm:$0xff]
        %v1111 = vld [vmem:[%s1109 + $0x8] sm:$0xff]
        %v1112 = vld [vmem:[%s1109 + $0x10] sm:$0xff]
        %v1113 = vld [vmem:[%s1109 + $0x18] sm:$0xff]
        %s1114 = scalar_lea.vmem [#allocation7], 16
        %v1115 = vld [vmem:[%s1114] sm:$0xff]
        %v1116 = vld [vmem:[%s1114 + $0x8] sm:$0xff]
        %v1118 = vsel %vm489, %v1105, 0
        %v1121 = vsel %vm489, %v1106, 0
        %v1124 = vsel %vm489, %v1107, 0
        %v1127 = vsel %vm489, %v1108, 0
        %1129 = vmatprep.subr.mxu0 0.0
        %1130 = vmatpush1.msra.mxu0 0.0
        %1131 = vmatprep.subr.mxu0 0.0
        %1132 = vmatpush1.msra.mxu0 0.0
        %1133 = vmatprep.subr.mxu0 0.0
        %1134 = vmatpush1.msra.mxu0 0.0
        %1135 = vmatprep.subr.mxu0 0.0
        %1136 = vmatpush1.msra.mxu0 0.0
        %1137 = vmatprep.subr.mxu0 0.0
        %1138 = vmatpush1.msra.mxu0 0.0
        %1139 = vmatprep.subr.mxu0 0.0
        %1140 = vmatpush1.msra.mxu0 0.0
        %1141 = vmatprep.subr.mxu0 0.0
        %1142 = vmatpush1.msra.mxu0 0.0
        %1143 = vmatprep.subr.mxu0 0.0
        %1144 = vmatpush1.msra.mxu0 0.0
        %1145 = vmatprep.subr.mxu0 0.0
        %1146 = vmatpush1.msra.mxu0 0.0
        %1147 = vmatprep.subr.mxu0 0.0
        %1148 = vmatpush1.msra.mxu0 0.0
        %1149 = vmatprep.subr.mxu0 0.0
        %1150 = vmatpush1.msra.mxu0 0.0
        %1151 = vmatprep.subr.mxu0 0.0
        %1152 = vmatpush1.msra.mxu0 0.0
        %1153 = vmatprep.subr.mxu0 0.0
        %1154 = vmatpush1.msra.mxu0 0.0
        %1155 = vmatprep.subr.mxu0 0.0
        %1156 = vmatpush1.msra.mxu0 0.0
        %1157 = vmatprep.subr.mxu0 0.0
        %1158 = vmatpush1.msra.mxu0 0.0
        %1159 = vmatprep.subr.mxu0 0.0
        %1160 = vmatpush1.msra.mxu0 %v1103
        %1161 = vmatprep.subr.mxu0 0.0
        %1162 = vmatpush2.msra.mxu0 0.0
        %1163 = vmatprep.subr.mxu0 0.0
        %1164 = vmatpush2.msra.mxu0 0.0
        %1165 = vmatprep.subr.mxu0 0.0
        %1166 = vmatpush2.msra.mxu0 0.0
        %1167 = vmatprep.subr.mxu0 0.0
        %1168 = vmatpush2.msra.mxu0 0.0
        %1169 = vmatprep.subr.mxu0 0.0
        %1170 = vmatpush2.msra.mxu0 0.0
        %1171 = vmatprep.subr.mxu0 0.0
        %1172 = vmatpush2.msra.mxu0 0.0
        %1173 = vmatprep.subr.mxu0 0.0
        %1174 = vmatpush2.msra.mxu0 0.0
        %1175 = vmatprep.subr.mxu0 0.0
        %1176 = vmatpush2.msra.mxu0 0.0
        %1177 = vmatprep.subr.mxu0 0.0
        %1178 = vmatpush2.msra.mxu0 0.0
        %1179 = vmatprep.subr.mxu0 0.0
        %1180 = vmatpush2.msra.mxu0 0.0
        %1181 = vmatprep.subr.mxu0 0.0
        %1182 = vmatpush2.msra.mxu0 0.0
        %1183 = vmatprep.subr.mxu0 0.0
        %1184 = vmatpush2.msra.mxu0 0.0
        %1185 = vmatprep.subr.mxu0 0.0
        %1186 = vmatpush2.msra.mxu0 0.0
        %1187 = vmatprep.subr.mxu0 0.0
        %1188 = vmatpush2.msra.mxu0 0.0
        %1189 = vmatprep.subr.mxu0 0.0
        %1190 = vmatpush2.msra.mxu0 0.0
        %1191 = vmatprep.subr.mxu0 0.0
        %1192 = vmatpush2.msra.mxu0 0.0
        %1193 = vmatprep.mubr.f32.mxu0 0.0
        %1194 = vmatmul.mubr.f32.gmra.mxu0 %v1118
        %v1195 = vpop.f32.mrf.mxu0
        %v1196 = vadd.f32 %v1059, %v1195
        %v1197 = vpop.f32.mrf.mxu0
        %1198 = vmatprep.mubr.f32.mxu0 0.0
        %1199 = vmatmul.mubr.f32.gmra.mxu0 %v1121
        %v1200 = vpop.f32.mrf.mxu0
        %v1201 = vadd.f32 %v1064, %v1200
        %v1202 = vpop.f32.mrf.mxu0
        %1203 = vmatprep.mubr.f32.mxu0 0.0
        %1204 = vmatmul.mubr.f32.gmra.mxu0 %v1124
        %v1205 = vpop.f32.mrf.mxu0
        %v1206 = vadd.f32 %v1069, %v1205
        %v1207 = vpop.f32.mrf.mxu0
        %1208 = vmatprep.mubr.f32.mxu0 0.0
        %1209 = vmatmul.mubr.f32.gmra.mxu0 %v1127
        %v1210 = vpop.f32.mrf.mxu0
        %v1211 = vadd.f32 %v1074, %v1210
        %v1212 = vpop.f32.mrf.mxu0
        %1213 = vdwg.mxu0
        %v1214 = vmul.f32 %v1196, 0.5
        %v1215 = vmul.f32 %v1201, 0.5
        %v1216 = vmul.f32 %v1206, 0.5
        %v1217 = vmul.f32 %v1211, 0.5
        %v1218 = vmul.f32 %v1196, 0.044715
        %v1219 = vmul.f32 %v1201, 0.044715
        %v1220 = vmul.f32 %v1206, 0.044715
        %v1221 = vmul.f32 %v1211, 0.044715
        %v1222 = vmul.f32 %v1218, %v1196
        %v1223 = vmul.f32 %v1219, %v1201
        %v1224 = vmul.f32 %v1220, %v1206
        %v1225 = vmul.f32 %v1221, %v1211
        %v1226 = vmul.f32 %v1222, %v1196
        %v1227 = vmul.f32 %v1223, %v1201
        %v1228 = vmul.f32 %v1224, %v1206
        %v1229 = vmul.f32 %v1225, %v1211
        %v1230 = vadd.f32 %v1196, %v1226
        %v1231 = vadd.f32 %v1201, %v1227
        %v1232 = vadd.f32 %v1206, %v1228
        %v1233 = vadd.f32 %v1211, %v1229
        %v1234 = vmul.f32 %v1230, 0.7978846
        %v1235 = vmul.f32 %v1231, 0.7978846
        %v1236 = vmul.f32 %v1232, 0.7978846
        %v1237 = vmul.f32 %v1233, 0.7978846
        %v1238 = vtanh.pop %v1234
        %v1239 = vtanh.pop %v1235
        %v1240 = vtanh.pop %v1236
        %v1241 = vtanh.pop %v1237
        %v1242 = vadd.f32 %v1238, 1.0
        %v1243 = vadd.f32 %v1239, 1.0
        %v1244 = vadd.f32 %v1240, 1.0
        %v1245 = vadd.f32 %v1241, 1.0
        %v1246 = vmul.f32 %v1214, %v1242
        %v1247 = vmul.f32 %v1215, %v1243
        %v1248 = vmul.f32 %v1216, %v1244
        %v1249 = vmul.f32 %v1217, %v1245
        %v1251 = vsel %vm623, %v1110, 0
        %v1254 = vsel %vm623, %v1111, 0
        %v1257 = vsel %vm623, %v1112, 0
        %v1260 = vsel %vm623, %v1113, 0
        %1262 = vmatprep.subr.mxu0 0.0
        %1263 = vmatpush1.msra.mxu0 0.0
        %1264 = vmatprep.subr.mxu0 0.0
        %1265 = vmatpush1.msra.mxu0 0.0
        %1266 = vmatprep.subr.mxu0 0.0
        %1267 = vmatpush1.msra.mxu0 0.0
        %1268 = vmatprep.subr.mxu0 0.0
        %1269 = vmatpush1.msra.mxu0 0.0
        %1270 = vmatprep.subr.mxu0 0.0
        %1271 = vmatpush1.msra.mxu0 0.0
        %1272 = vmatprep.subr.mxu0 0.0
        %1273 = vmatpush1.msra.mxu0 0.0
        %1274 = vmatprep.subr.mxu0 0.0
        %1275 = vmatpush1.msra.mxu0 0.0
        %1276 = vmatprep.subr.mxu0 0.0
        %1277 = vmatpush1.msra.mxu0 0.0
        %1278 = vmatprep.subr.mxu0 0.0
        %1279 = vmatpush1.msra.mxu0 0.0
        %1280 = vmatprep.subr.mxu0 0.0
        %1281 = vmatpush1.msra.mxu0 0.0
        %1282 = vmatprep.subr.mxu0 0.0
        %1283 = vmatpush1.msra.mxu0 0.0
        %1284 = vmatprep.subr.mxu0 0.0
        %1285 = vmatpush1.msra.mxu0 0.0
        %1286 = vmatprep.subr.mxu0 0.0
        %1287 = vmatpush1.msra.mxu0 %v1249
        %1288 = vmatprep.subr.mxu0 0.0
        %1289 = vmatpush1.msra.mxu0 %v1248
        %1290 = vmatprep.subr.mxu0 0.0
        %1291 = vmatpush1.msra.mxu0 %v1247
        %1292 = vmatprep.subr.mxu0 0.0
        %1293 = vmatpush1.msra.mxu0 %v1246
        %1294 = vmatprep.subr.mxu0 0.0
        %1295 = vmatpush2.msra.mxu0 0.0
        %1296 = vmatprep.subr.mxu0 0.0
        %1297 = vmatpush2.msra.mxu0 0.0
        %1298 = vmatprep.subr.mxu0 0.0
        %1299 = vmatpush2.msra.mxu0 0.0
        %1300 = vmatprep.subr.mxu0 0.0
        %1301 = vmatpush2.msra.mxu0 0.0
        %1302 = vmatprep.subr.mxu0 0.0
        %1303 = vmatpush2.msra.mxu0 0.0
        %1304 = vmatprep.subr.mxu0 0.0
        %1305 = vmatpush2.msra.mxu0 0.0
        %1306 = vmatprep.subr.mxu0 0.0
        %1307 = vmatpush2.msra.mxu0 0.0
        %1308 = vmatprep.subr.mxu0 0.0
        %1309 = vmatpush2.msra.mxu0 0.0
        %1310 = vmatprep.subr.mxu0 0.0
        %1311 = vmatpush2.msra.mxu0 0.0
        %1312 = vmatprep.subr.mxu0 0.0
        %1313 = vmatpush2.msra.mxu0 0.0
        %1314 = vmatprep.subr.mxu0 0.0
        %1315 = vmatpush2.msra.mxu0 0.0
        %1316 = vmatprep.subr.mxu0 0.0
        %1317 = vmatpush2.msra.mxu0 0.0
        %1318 = vmatprep.subr.mxu0 0.0
        %1319 = vmatpush2.msra.mxu0 0.0
        %1320 = vmatprep.subr.mxu0 0.0
        %1321 = vmatpush2.msra.mxu0 0.0
        %1322 = vmatprep.subr.mxu0 0.0
        %1323 = vmatpush2.msra.mxu0 0.0
        %1324 = vmatprep.subr.mxu0 0.0
        %1325 = vmatpush2.msra.mxu0 0.0
        %1326 = vmatprep.mubr.f32.mxu0 0.0
        %1327 = vmatmul.mubr.f32.gmra.mxu0 %v1251
        %v1328 = vpop.f32.mrf.mxu0
        %v1329 = vadd.f32 %v471, %v1328
        %v1330 = vpop.f32.mrf.mxu0
        %1331 = vmatprep.mubr.f32.mxu0 0.0
        %1332 = vmatmul.mubr.f32.gmra.mxu0 %v1254
        %v1333 = vpop.f32.mrf.mxu0
        %v1334 = vadd.f32 %v472, %v1333
        %v1335 = vpop.f32.mrf.mxu0
        %1336 = vmatprep.mubr.f32.mxu0 0.0
        %1337 = vmatmul.mubr.f32.gmra.mxu0 %v1257
        %v1338 = vpop.f32.mrf.mxu0
        %v1339 = vadd.f32 %v473, %v1338
        %v1340 = vpop.f32.mrf.mxu0
        %1341 = vmatprep.mubr.f32.mxu0 0.0
        %1342 = vmatmul.mubr.f32.gmra.mxu0 %v1260
        %v1343 = vpop.f32.mrf.mxu0
        %v1344 = vadd.f32 %v474, %v1343
        %v1345 = vpop.f32.mrf.mxu0
        %1346 = vdwg.mxu0
        %v1347 = vmul.f32 %v1329, 0.5
        %v1348 = vmul.f32 %v1334, 0.5
        %v1349 = vmul.f32 %v1339, 0.5
        %v1350 = vmul.f32 %v1344, 0.5
        %v1351 = vmul.f32 %v1329, 0.044715
        %v1352 = vmul.f32 %v1334, 0.044715
        %v1353 = vmul.f32 %v1339, 0.044715
        %v1354 = vmul.f32 %v1344, 0.044715
        %v1355 = vmul.f32 %v1351, %v1329
        %v1356 = vmul.f32 %v1352, %v1334
        %v1357 = vmul.f32 %v1353, %v1339
        %v1358 = vmul.f32 %v1354, %v1344
        %v1359 = vmul.f32 %v1355, %v1329
        %v1360 = vmul.f32 %v1356, %v1334
        %v1361 = vmul.f32 %v1357, %v1339
        %v1362 = vmul.f32 %v1358, %v1344
        %v1363 = vadd.f32 %v1329, %v1359
        %v1364 = vadd.f32 %v1334, %v1360
        %v1365 = vadd.f32 %v1339, %v1361
        %v1366 = vadd.f32 %v1344, %v1362
        %v1367 = vmul.f32 %v1363, 0.7978846
        %v1368 = vmul.f32 %v1364, 0.7978846
        %v1369 = vmul.f32 %v1365, 0.7978846
        %v1370 = vmul.f32 %v1366, 0.7978846
        %v1371 = vtanh.pop %v1367
        %v1372 = vtanh.pop %v1368
        %v1373 = vtanh.pop %v1369
        %v1374 = vtanh.pop %v1370
        %v1375 = vadd.f32 %v1371, 1.0
        %v1376 = vadd.f32 %v1372, 1.0
        %v1377 = vadd.f32 %v1373, 1.0
        %v1378 = vadd.f32 %v1374, 1.0
        %v1379 = vmul.f32 %v1347, %v1375
        %v1380 = vmul.f32 %v1348, %v1376
        %v1381 = vmul.f32 %v1349, %v1377
        %v1382 = vmul.f32 %v1350, %v1378
        %v1384 = vsel %vm623, %v1115, 0
        %v1387 = vsel %vm623, %v1116, 0
        %1389 = vmatprep.subr.mxu0 0.0
        %1390 = vmatpush1.msra.mxu0 0.0
        %1391 = vmatprep.subr.mxu0 0.0
        %1392 = vmatpush1.msra.mxu0 0.0
        %1393 = vmatprep.subr.mxu0 0.0
        %1394 = vmatpush1.msra.mxu0 0.0
        %1395 = vmatprep.subr.mxu0 0.0
        %1396 = vmatpush1.msra.mxu0 0.0
        %1397 = vmatprep.subr.mxu0 0.0
        %1398 = vmatpush1.msra.mxu0 0.0
        %1399 = vmatprep.subr.mxu0 0.0
        %1400 = vmatpush1.msra.mxu0 0.0
        %1401 = vmatprep.subr.mxu0 0.0
        %1402 = vmatpush1.msra.mxu0 0.0
        %1403 = vmatprep.subr.mxu0 0.0
        %1404 = vmatpush1.msra.mxu0 0.0
        %1405 = vmatprep.subr.mxu0 0.0
        %1406 = vmatpush1.msra.mxu0 0.0
        %1407 = vmatprep.subr.mxu0 0.0
        %1408 = vmatpush1.msra.mxu0 0.0
        %1409 = vmatprep.subr.mxu0 0.0
        %1410 = vmatpush1.msra.mxu0 0.0
        %1411 = vmatprep.subr.mxu0 0.0
        %1412 = vmatpush1.msra.mxu0 0.0
        %1413 = vmatprep.subr.mxu0 0.0
        %1414 = vmatpush1.msra.mxu0 %v1382
        %1415 = vmatprep.subr.mxu0 0.0
        %1416 = vmatpush1.msra.mxu0 %v1381
        %1417 = vmatprep.subr.mxu0 0.0
        %1418 = vmatpush1.msra.mxu0 %v1380
        %1419 = vmatprep.subr.mxu0 0.0
        %1420 = vmatpush1.msra.mxu0 %v1379
        %1421 = vmatprep.subr.mxu0 0.0
        %1422 = vmatpush2.msra.mxu0 0.0
        %1423 = vmatprep.subr.mxu0 0.0
        %1424 = vmatpush2.msra.mxu0 0.0
        %1425 = vmatprep.subr.mxu0 0.0
        %1426 = vmatpush2.msra.mxu0 0.0
        %1427 = vmatprep.subr.mxu0 0.0
        %1428 = vmatpush2.msra.mxu0 0.0
        %1429 = vmatprep.subr.mxu0 0.0
        %1430 = vmatpush2.msra.mxu0 0.0
        %1431 = vmatprep.subr.mxu0 0.0
        %1432 = vmatpush2.msra.mxu0 0.0
        %1433 = vmatprep.subr.mxu0 0.0
        %1434 = vmatpush2.msra.mxu0 0.0
        %1435 = vmatprep.subr.mxu0 0.0
        %1436 = vmatpush2.msra.mxu0 0.0
        %1437 = vmatprep.subr.mxu0 0.0
        %1438 = vmatpush2.msra.mxu0 0.0
        %1439 = vmatprep.subr.mxu0 0.0
        %1440 = vmatpush2.msra.mxu0 0.0
        %1441 = vmatprep.subr.mxu0 0.0
        %1442 = vmatpush2.msra.mxu0 0.0
        %1443 = vmatprep.subr.mxu0 0.0
        %1444 = vmatpush2.msra.mxu0 0.0
        %1445 = vmatprep.subr.mxu0 0.0
        %1446 = vmatpush2.msra.mxu0 0.0
        %1447 = vmatprep.subr.mxu0 0.0
        %1448 = vmatpush2.msra.mxu0 0.0
        %1449 = vmatprep.subr.mxu0 0.0
        %1450 = vmatpush2.msra.mxu0 0.0
        %1451 = vmatprep.subr.mxu0 0.0
        %1452 = vmatpush2.msra.mxu0 0.0
        %1453 = vmatprep.mubr.f32.mxu0 0.0
        %1454 = vmatmul.mubr.f32.gmra.mxu0 %v1384
        %v1455 = vpop.f32.mrf.mxu0
        %v1456 = vadd.f32 %v475, %v1455
        %v1457 = vpop.f32.mrf.mxu0
        %1458 = vmatprep.mubr.f32.mxu0 0.0
        %1459 = vmatmul.mubr.f32.gmra.mxu0 %v1387
        %v1460 = vpop.f32.mrf.mxu0
        %v1461 = vadd.f32 %v476, %v1460
        %v1462 = vpop.f32.mrf.mxu0
        %1463 = vdwg.mxu0
        %v1464 = vtanh.pop %v1456
        %v1465 = vmul.f32 %v1464, 1.442695
        %v1466 = vpow.pop %v1465
        %v1467 = vmul.f32 %v1103, %v1466
        %v1468 = vadd.f32 %v1467, %v1461
        %v1469 = vrot.slane %v1464, 4
        %v1470 = vadd.f32 %v1464, %v1469
        %v1471 = vrot.slane %v1470, 2
        %v1472 = vadd.f32 %v1470, %v1471
        %v1473 = vrot.slane %v1472, 1
        %v1474 = vadd.f32 %v1472, %v1473
        %v1475 = vsub.f32 %v849, %v1474
        %v1476 = vmul.f32 %v1468, %v1089
        %v1477 = vadd.f32 %v1476, %v1094
        %v1478 = vsub.f32 %v1475, %v1099
        %1479 = vst [vmem:[%s445] sm:$0xff] %v1477
        %1480 = vst [vmem:[%s451] sm:$0x1] %v1478
        %s1481 = sand.u32 %s261, 1
        %s1482 = scalar_lea.sflag [#allocation4], %s1481
        %s1483 = sand.u32 %s261, 1
        %s1484 = smul.addr %s1483, 8
        %s1485 = scalar_lea.vmem [#allocation8], %s1484
        %s1486 = sand.u32 %s287, 1
        %s1487 = scalar_lea.sflag [#allocation10], %s1486
        %s1488 = sand.u32 %s287, 1
        %s1489 = scalar_lea.vmem [#allocation9], %s1488
        // Predicated region
        $region73: #{tpu_custom_call.1} parent=59 // pred_check
          %p1490 = pneg %p271
        $region74: #{tpu_custom_call.1} parent=59 // pred_check_branch
          %1492 = sbr.rel (%p1490) target = $region76
        $region75: #{tpu_custom_call.1} parent=59 // pred_region
          %s1494 = ssub.s32 128, 128
          %1495 = vsyncadd %s1482, %s1494
          %s1496 = smul.addr %s33, 128
          %s1497 = scalar_lea.hbm %s10, %s1496
          %s1499 = sshll.u32 %s1485, 4
          %s1500 = int_to_ptr.vmem [resolvable:$true] %s1499
          %1502 = dma.vmem_to_hbm [thread:$0]  %s1500, 128, %s1497, %s1482
        $region76: #{tpu_custom_call.1} parent=59 // pred_fallthru
          _
        // Predicated region
        $region77: #{tpu_custom_call.1} parent=59 // pred_check
          %p1503 = pneg %p297
        $region78: #{tpu_custom_call.1} parent=59 // pred_check_branch
          %1505 = sbr.rel (%p1503) target = $region80
        $region79: #{tpu_custom_call.1} parent=59 // pred_region
          %s1507 = ssub.s32 16, 16
          %1508 = vsyncadd %s1487, %s1507
          %s1509 = smul.addr %s33, 16
          %s1510 = scalar_lea.hbm %s11, %s1509
          %s1512 = sshll.u32 %s1489, 4
          %s1513 = int_to_ptr.vmem [resolvable:$true] %s1512
          %1515 = dma.vmem_to_hbm [thread:$0]  %s1513, 16, %s1510, %s1487
        $region80: #{tpu_custom_call.1} parent=59 // pred_fallthru
          _
      $region60: #{tpu_custom_call.1} parent=5 // pred_fallthru
        _
      %p1516 = scmp.le.s32.totalorder 2, %s28
      // Predicated region
      $region81: #{tpu_custom_call.1} parent=5 // pred_check
        %p1517 = pneg %p1516
      $region82: #{tpu_custom_call.1} parent=5 // pred_check_branch
        %1519 = sbr.rel (%p1517) target = $region84
      $region83: #{tpu_custom_call.1} parent=5 // pred_region
        %s1520 = ssub.s32 %s28, 2
        // Predicated region
        $region85: #{tpu_custom_call.1} parent=83 // pred_check
          %p1521 = pneg %p277
        $region86: #{tpu_custom_call.1} parent=83 // pred_check_branch
          %1523 = sbr.rel (%p1521) target = $region88
        $region87: #{tpu_custom_call.1} parent=83 // pred_region
          %s1524 = sand.u32 %s262, 1
          %s1525 = scalar_lea.sflag [#allocation4], %s1524
          %s1526 = sand.u32 %s262, 1
          %s1527 = smul.addr %s1526, 8
          %s1528 = scalar_lea.vmem [#allocation8], %s1527
          %1529 = dma.done %s1525, 128
        $region88: #{tpu_custom_call.1} parent=83 // pred_fallthru
          _
        // Predicated region
        $region89: #{tpu_custom_call.1} parent=83 // pred_check
          %p1530 = pneg %p303
        $region90: #{tpu_custom_call.1} parent=83 // pred_check_branch
          %1532 = sbr.rel (%p1530) target = $region92
        $region91: #{tpu_custom_call.1} parent=83 // pred_region
          %s1533 = sand.u32 %s288, 1
          %s1534 = scalar_lea.sflag [#allocation10], %s1533
          %s1535 = sand.u32 %s288, 1
          %s1536 = scalar_lea.vmem [#allocation9], %s1535
          %1537 = dma.done %s1534, 16
        $region92: #{tpu_custom_call.1} parent=83 // pred_fallthru
          _
      $region84: #{tpu_custom_call.1} parent=5 // pred_fallthru
        _
    $region6: #{tpu_custom_call.1} parent=1 // loop_footer
      %s32 = sadd.s32 1, %s28
    $region7: #{tpu_custom_call.1} parent=1 // loop_footer_branch
      %27 = sbr.rel target = $region3
    $region8: #{tpu_custom_call.1} parent=1 // loop_exit
      _
    %1538 = vsyncpa [#allocation3], 1
    %s1539 = scalar_lea.sflag [#allocation3], 1
    %1540 = vsyncpa %s1539, 1
    %1541 = vsyncpa [#allocation6], 1
    %1542 = vsyncpa [#allocation4], 1
    %s1543 = scalar_lea.sflag [#allocation4], 1
    %1544 = vsyncpa %s1543, 1
    %1545 = vsyncpa [#allocation10], 1
    %s1546 = scalar_lea.sflag [#allocation10], 1
    %1547 = vsyncpa %s1546, 1

</llo_original>
